<compile_context>
chip_gen: v7x
topology: tpu7x:2x2x1
jax: 0.10.0
libtpu: 0.0.40
codegen_flags: <defaults>
</compile_context>

<pallas_src>
import jax
import jax.numpy as jnp
from jax.experimental import pallas as pl
from jax.experimental.pallas import tpu as pltpu

# Small, shape-consistent config (in_channels == out_channels so cells can be stacked).
B = 2              # batch_size of the example
N = 16             # num_nodes
C = 32             # in_channels == out_channels
NUM_CELLS = 3
NUM_OPS = 2
NUM_CLASSES = 1    # PCE prediction dimension
LANES = 128        # lane-dense packing / output width
GROUP_B = 8        # batch elements per grid step -> GN = 128 stacked rows (MXU-native M)
GN = GROUP_B * N   # stacked node count per group

assert GN == LANES, "group node count must fill the 128-lane adjacency tile"
assert NUM_CELLS <= 8 and GROUP_B <= 8 and NUM_CLASSES <= LANES and C <= LANES

# packed-parameter row offsets (all multiples of 8 -> sublane aligned)
WROWS    = NUM_CELLS * 2 * C    # 192 : per-cell [a0*W_gcn ; a1*W_lin] slabs, lane-0 aligned
BIAS_OFF = WROWS                # 192 : per-cell combined bias rows (8-row slab)
FCW_OFF  = BIAS_OFF + 8         # 200 : lane-padded fc weight (C rows, real column = lane 0)
FCB_OFF  = FCW_OFF + C          # 232 : lane-padded fc bias row (8-row slab)
POOL_OFF = FCB_OFF + 8          # 240 : (8, GN) per-group mean-pooling matrix
ADJ_OFF  = POOL_OFF + 8         # 248 : (GN, GN) block-diagonal A_hat for one group
PARAM_ROWS = ADJ_OFF + GN       # 376


def darts_graphnet_kernel(x_ref, p_ref, out_ref):
    h = x_ref[...]                                    # (GN, C)   stacked node features
    adj = p_ref[ADJ_OFF:ADJ_OFF + GN, :]              # (GN, GN)  block-diagonal A_hat
    biases = p_ref[BIAS_OFF:BIAS_OFF + 8, :]          # (8, 128)  row c = combined bias of cell c

    for c in range(NUM_CELLS):
        # alpha-prescaled, lane-0-aligned weight slabs (no lane-offset slices anywhere)
        wg = p_ref[(2 * c) * C:(2 * c + 1) * C, :]        # (C, 128), lanes 0:C = a0_c*W_gcn
        wl = p_ref[(2 * c + 1) * C:(2 * c + 2) * C, :]    # (C, 128), lanes 0:C = a1_c*W_lin
        hg = jnp.dot(h, wg, preferred_element_type=jnp.float32)    # (GN, 128)
        hl = jnp.dot(h, wl, preferred_element_type=jnp.float32)    # (GN, 128)
        # DynamicCell: a0*(A(h W_gcn)+b_gcn) + a1*(h W_lin + b_lin), alphas already folded in
        h_full = (jnp.dot(adj, hg, preferred_element_type=jnp.float32)
                  + hl + biases[c:c + 1, :])              # (GN, 128); lanes >= C stay zero
        h = h_full[:, :C]                                 # lane-0 aligned slice (no rotation)

    # global_mean_pool per batch slot via an (8, GN) pooling matrix, then one lane-dense FC
    # producing a full (8, 128) output slab (unmasked store); prediction lives in lane 0.
    pool = p_ref[POOL_OFF:POOL_OFF + 8, :]            # (8, GN)
    wfc = p_ref[FCW_OFF:FCW_OFF + C, :]               # (C, 128)
    bfc = p_ref[FCB_OFF:FCB_OFF + 1, :]               # (1, 128)
    pooled = jnp.dot(pool, h, preferred_element_type=jnp.float32)      # (8, C)
    out_ref[...] = jnp.dot(pooled, wfc, preferred_element_type=jnp.float32) + bfc


def prepare_packed_params(adj, alpha, w_gcn, b_gcn, w_lin, b_lin, w_fc, b_fc):
    """Fold softmax(alpha) into the shared op weights per cell and pack weights, combined
    biases, fc, pooling matrix and the block-diagonal adjacency into ONE (376, 128) f32
    buffer.  Hoisted out of the per-inference path: call once, reuse while only x changes."""
    mix = jax.nn.softmax(alpha, axis=1)               # (NUM_CELLS, NUM_OPS)

    def lanes(a):                                     # pad last dim to 128 lanes
        a = jnp.asarray(a, jnp.float32)
        return jnp.pad(a, ((0, 0), (0, LANES - a.shape[1])))

    blocks = []
    for c in range(NUM_CELLS):
        blocks.append(lanes(mix[c, 0] * w_gcn))       # (C, 128) lane-0 aligned
        blocks.append(lanes(mix[c, 1] * w_lin))       # (C, 128) lane-0 aligned
    bias_rows = jnp.stack([mix[c, 0] * b_gcn[0] + mix[c, 1] * b_lin[0]
                           for c in range(NUM_CELLS)])                    # (NUM_CELLS, C)
    blocks.append(lanes(jnp.pad(bias_rows, ((0, 8 - NUM_CELLS), (0, 0)))))  # (8, 128)
    blocks.append(lanes(w_fc))                                              # (C, 128)
    blocks.append(lanes(jnp.pad(b_fc, ((0, 8 - 1), (0, 0)))))               # (8, 128)
    # per-slot mean pooling matrix over a group of GROUP_B batch elements
    pool = jnp.kron(jnp.eye(GROUP_B, dtype=jnp.float32),
                    jnp.full((1, N), 1.0 / N, jnp.float32))                 # (8, GN)
    blocks.append(lanes(pool))
    # block-diagonal GCN-normalized adjacency for one group (exact: shared edge_index)
    adj_block = jnp.kron(jnp.eye(GROUP_B, dtype=jnp.float32),
                         jnp.asarray(adj, jnp.float32))                     # (GN, GN)
    blocks.append(lanes(adj_block))

    packed = jnp.concatenate(blocks, axis=0)
    assert packed.shape == (PARAM_ROWS, LANES)
    return packed


@jax.jit
def darts_graphnet_forward(x, packed_params):
    """Per-inference path: pad batch to groups of GROUP_B, one pallas_call, slice outputs."""
    bx = x.shape[0]
    num_groups = (bx + GROUP_B - 1) // GROUP_B
    b_pad = num_groups * GROUP_B
    x_pad = jnp.pad(x, ((0, b_pad - bx), (0, 0), (0, 0))).reshape(num_groups * GN, C)

    out_pad = pl.pallas_call(
        darts_graphnet_kernel,
        out_shape=jax.ShapeDtypeStruct((num_groups * 8, LANES), jnp.float32),
        grid=(num_groups,),
        in_specs=[pl.BlockSpec((GN, C), lambda g: (g, 0)),                 # per-group features
                  pl.BlockSpec((PARAM_ROWS, LANES), lambda g: (0, 0))],    # resident params
        out_specs=pl.BlockSpec((8, LANES), lambda g: (g, 0)),
        compiler_params=pltpu.CompilerParams(dimension_semantics=("parallel",)),
    )(x_pad, packed_params)

    out = out_pad.reshape(num_groups, 8, LANES)[:, :GROUP_B, :NUM_CLASSES]
    return out.reshape(b_pad, NUM_CLASSES)[:bx]


def build_gcn_adjacency(edge_index, num_nodes):
    """Dense GCN normalization D^{-1/2} (A + I) D^{-1/2} from edge_index (2, E). Glue."""
    src, dst = edge_index[0], edge_index[1]
    a = jnp.zeros((num_nodes, num_nodes), jnp.float32).at[src, dst].set(1.0)
    idx = jnp.arange(num_nodes)
    a = a.at[idx, idx].set(1.0)                       # self loops
    deg = jnp.sum(a, axis=1)
    dinv = 1.0 / jnp.sqrt(deg)
    return a * dinv[:, None] * dinv[None, :]


def reference_forward(x, adj, alpha, w_gcn, b_gcn, w_lin, b_lin, w_fc, b_fc):
    """Pure-JAX reference mirroring the original per-batch module semantics."""
    mix = jax.nn.softmax(alpha, axis=1)
    h = x
    for c in range(NUM_CELLS):
        gcn = jnp.einsum("ij,bjc->bic", adj, h @ w_gcn) + b_gcn
        lin = h @ w_lin + b_lin
        h = mix[c, 0] * gcn + mix[c, 1] * lin
    pooled = jnp.mean(h, axis=1)                      # global_mean_pool over nodes
    return pooled @ w_fc + b_fc


if __name__ == "__main__":
    key = jax.random.PRNGKey(0)
    ks = jax.random.split(key, 8)

    # Node features (batch_size, num_nodes, in_channels)
    x = jax.random.normal(ks[0], (B, N, C), dtype=jnp.float32)

    # edge_index (2, num_edges): bidirectional ring over N nodes
    src = jnp.concatenate([jnp.arange(N), (jnp.arange(N) + 1) % N])
    dst = jnp.concatenate([(jnp.arange(N) + 1) % N, jnp.arange(N)])
    edge_index = jnp.stack([src, dst]).astype(jnp.int32)             # (2, 2N)
    adj = build_gcn_adjacency(edge_index, N)

    # Deterministic synthetic parameters
    alpha = jax.random.normal(ks[1], (NUM_CELLS, NUM_OPS), dtype=jnp.float32)  # per-cell alphas
    w_gcn = jax.random.normal(ks[2], (C, C), dtype=jnp.float32) * 0.1
    b_gcn = jax.random.normal(ks[3], (1, C), dtype=jnp.float32) * 0.1
    w_lin = jax.random.normal(ks[4], (C, C), dtype=jnp.float32) * 0.1
    b_lin = jax.random.normal(ks[5], (1, C), dtype=jnp.float32) * 0.1
    w_fc = jax.random.normal(ks[6], (C, NUM_CLASSES), dtype=jnp.float32) * 0.1
    b_fc = jax.random.normal(ks[7], (1, NUM_CLASSES), dtype=jnp.float32) * 0.1

    # Packing (softmax fold, kron, concatenation) happens ONCE, outside the inference path.
    packed_params = prepare_packed_params(adj, alpha, w_gcn, b_gcn, w_lin, b_lin, w_fc, b_fc)
    packed_params = jax.block_until_ready(packed_params)

    out = darts_graphnet_forward(x, packed_params)
    jax.block_until_ready(out)
    assert out.shape == (B, NUM_CLASSES) and out.dtype == jnp.float32

    ref = reference_forward(x, adj, alpha, w_gcn, b_gcn, w_lin, b_lin, w_fc, b_fc)
    assert jnp.allclose(out, ref, atol=1e-3, rtol=1e-3), (out, ref)

    print("KERNEL_OK")
</pallas_src>

<mosaic_0001>
module attributes {stable_mosaic.version = 11 : i64} {
  func.func @darts_graphnet_kernel(%arg0: i32, %arg1: memref<128x32xf32, #tpu.memory_space<vmem>>, %arg2: memref<376x128xf32, #tpu.memory_space<vmem>>, %arg3: memref<8x128xf32, #tpu.memory_space<vmem>>) attributes {dimension_semantics = [#tpu.dimension_semantics<parallel>], iteration_bounds = array<i64: 1>, scalar_prefetch = 0 : i64, scratch_operands = 0 : i64, tpu.core_type = #tpu.core_type<tc>, window_params = [{transform_indices = @transform_0, window_bounds = array<i64: 128, 32>}, {pipeline_mode = #tpu.pipeline_mode<synchronous>, transform_indices = @transform_1, window_bounds = array<i64: 376, 128>}, {transform_indices = @transform_2, window_bounds = array<i64: 8, 128>}]} {
    %c0 = arith.constant 0 : index
    %c0_0 = arith.constant 0 : index
    %0 = vector.load %arg1[%c0, %c0_0] : memref<128x32xf32, #tpu.memory_space<vmem>>, vector<128x32xf32>
    %c248 = arith.constant 248 : index
    %c0_1 = arith.constant 0 : index
    %1 = vector.load %arg2[%c248, %c0_1] : memref<376x128xf32, #tpu.memory_space<vmem>>, vector<128x128xf32>
    %c192 = arith.constant 192 : index
    %c0_2 = arith.constant 0 : index
    %2 = vector.load %arg2[%c192, %c0_2] : memref<376x128xf32, #tpu.memory_space<vmem>>, vector<8x128xf32>
    %c0_3 = arith.constant 0 : index
    %c0_4 = arith.constant 0 : index
    %3 = vector.load %arg2[%c0_3, %c0_4] : memref<376x128xf32, #tpu.memory_space<vmem>>, vector<32x128xf32>
    %c32 = arith.constant 32 : index
    %c0_5 = arith.constant 0 : index
    %4 = vector.load %arg2[%c32, %c0_5] : memref<376x128xf32, #tpu.memory_space<vmem>>, vector<32x128xf32>
    %cst = arith.constant dense<0.000000e+00> : vector<128x128xf32>
    %5 = tpu.matmul %0, %3, %cst {dimension_numbers = #tpu.dot_dimension_numbers<[1], [0], [0], [1], [0, 0, 1, 1], [], []>} : vector<128x32xf32>, vector<32x128xf32>, vector<128x128xf32> -> vector<128x128xf32>
    %cst_6 = arith.constant dense<0.000000e+00> : vector<128x128xf32>
    %6 = tpu.matmul %0, %4, %cst_6 {dimension_numbers = #tpu.dot_dimension_numbers<[1], [0], [0], [1], [0, 0, 1, 1], [], []>} : vector<128x32xf32>, vector<32x128xf32>, vector<128x128xf32> -> vector<128x128xf32>
    %cst_7 = arith.constant dense<0.000000e+00> : vector<128x128xf32>
    %7 = tpu.matmul %1, %5, %cst_7 {dimension_numbers = #tpu.dot_dimension_numbers<[1], [0], [0], [1], [0, 0, 1, 1], [], []>} : vector<128x128xf32>, vector<128x128xf32>, vector<128x128xf32> -> vector<128x128xf32>
    %8 = arith.addf %7, %6 : vector<128x128xf32>
    %9 = vector.extract_strided_slice %2 {offsets = [0, 0], sizes = [1, 128], strides = [1, 1]} : vector<8x128xf32> to vector<1x128xf32>
    %10 = vector.broadcast %9 : vector<1x128xf32> to vector<128x128xf32>
    %11 = arith.addf %8, %10 : vector<128x128xf32>
    %12 = vector.extract_strided_slice %11 {offsets = [0, 0], sizes = [128, 32], strides = [1, 1]} : vector<128x128xf32> to vector<128x32xf32>
    %c64 = arith.constant 64 : index
    %c0_8 = arith.constant 0 : index
    %13 = vector.load %arg2[%c64, %c0_8] : memref<376x128xf32, #tpu.memory_space<vmem>>, vector<32x128xf32>
    %c96 = arith.constant 96 : index
    %c0_9 = arith.constant 0 : index
    %14 = vector.load %arg2[%c96, %c0_9] : memref<376x128xf32, #tpu.memory_space<vmem>>, vector<32x128xf32>
    %cst_10 = arith.constant dense<0.000000e+00> : vector<128x128xf32>
    %15 = tpu.matmul %12, %13, %cst_10 {dimension_numbers = #tpu.dot_dimension_numbers<[1], [0], [0], [1], [0, 0, 1, 1], [], []>} : vector<128x32xf32>, vector<32x128xf32>, vector<128x128xf32> -> vector<128x128xf32>
    %cst_11 = arith.constant dense<0.000000e+00> : vector<128x128xf32>
    %16 = tpu.matmul %12, %14, %cst_11 {dimension_numbers = #tpu.dot_dimension_numbers<[1], [0], [0], [1], [0, 0, 1, 1], [], []>} : vector<128x32xf32>, vector<32x128xf32>, vector<128x128xf32> -> vector<128x128xf32>
    %cst_12 = arith.constant dense<0.000000e+00> : vector<128x128xf32>
    %17 = tpu.matmul %1, %15, %cst_12 {dimension_numbers = #tpu.dot_dimension_numbers<[1], [0], [0], [1], [0, 0, 1, 1], [], []>} : vector<128x128xf32>, vector<128x128xf32>, vector<128x128xf32> -> vector<128x128xf32>
    %18 = arith.addf %17, %16 : vector<128x128xf32>
    %19 = vector.extract_strided_slice %2 {offsets = [1, 0], sizes = [1, 128], strides = [1, 1]} : vector<8x128xf32> to vector<1x128xf32>
    %20 = vector.broadcast %19 : vector<1x128xf32> to vector<128x128xf32>
    %21 = arith.addf %18, %20 : vector<128x128xf32>
    %22 = vector.extract_strided_slice %21 {offsets = [0, 0], sizes = [128, 32], strides = [1, 1]} : vector<128x128xf32> to vector<128x32xf32>
    %c128 = arith.constant 128 : index
    %c0_13 = arith.constant 0 : index
    %23 = vector.load %arg2[%c128, %c0_13] : memref<376x128xf32, #tpu.memory_space<vmem>>, vector<32x128xf32>
    %c160 = arith.constant 160 : index
    %c0_14 = arith.constant 0 : index
    %24 = vector.load %arg2[%c160, %c0_14] : memref<376x128xf32, #tpu.memory_space<vmem>>, vector<32x128xf32>
    %cst_15 = arith.constant dense<0.000000e+00> : vector<128x128xf32>
    %25 = tpu.matmul %22, %23, %cst_15 {dimension_numbers = #tpu.dot_dimension_numbers<[1], [0], [0], [1], [0, 0, 1, 1], [], []>} : vector<128x32xf32>, vector<32x128xf32>, vector<128x128xf32> -> vector<128x128xf32>
    %cst_16 = arith.constant dense<0.000000e+00> : vector<128x128xf32>
    %26 = tpu.matmul %22, %24, %cst_16 {dimension_numbers = #tpu.dot_dimension_numbers<[1], [0], [0], [1], [0, 0, 1, 1], [], []>} : vector<128x32xf32>, vector<32x128xf32>, vector<128x128xf32> -> vector<128x128xf32>
    %cst_17 = arith.constant dense<0.000000e+00> : vector<128x128xf32>
    %27 = tpu.matmul %1, %25, %cst_17 {dimension_numbers = #tpu.dot_dimension_numbers<[1], [0], [0], [1], [0, 0, 1, 1], [], []>} : vector<128x128xf32>, vector<128x128xf32>, vector<128x128xf32> -> vector<128x128xf32>
    %28 = arith.addf %27, %26 : vector<128x128xf32>
    %29 = vector.extract_strided_slice %2 {offsets = [2, 0], sizes = [1, 128], strides = [1, 1]} : vector<8x128xf32> to vector<1x128xf32>
    %30 = vector.broadcast %29 : vector<1x128xf32> to vector<128x128xf32>
    %31 = arith.addf %28, %30 : vector<128x128xf32>
    %32 = vector.extract_strided_slice %31 {offsets = [0, 0], sizes = [128, 32], strides = [1, 1]} : vector<128x128xf32> to vector<128x32xf32>
    %c240 = arith.constant 240 : index
    %c0_18 = arith.constant 0 : index
    %33 = vector.load %arg2[%c240, %c0_18] : memref<376x128xf32, #tpu.memory_space<vmem>>, vector<8x128xf32>
    %c200 = arith.constant 200 : index
    %c0_19 = arith.constant 0 : index
    %34 = vector.load %arg2[%c200, %c0_19] : memref<376x128xf32, #tpu.memory_space<vmem>>, vector<32x128xf32>
    %c232 = arith.constant 232 : index
    %c0_20 = arith.constant 0 : index
    %35 = vector.load %arg2[%c232, %c0_20] : memref<376x128xf32, #tpu.memory_space<vmem>>, vector<1x128xf32>
    %cst_21 = arith.constant dense<0.000000e+00> : vector<8x32xf32>
    %36 = tpu.matmul %33, %32, %cst_21 {dimension_numbers = #tpu.dot_dimension_numbers<[1], [0], [0], [1], [0, 0, 1, 1], [], []>} : vector<8x128xf32>, vector<128x32xf32>, vector<8x32xf32> -> vector<8x32xf32>
    %cst_22 = arith.constant dense<0.000000e+00> : vector<8x128xf32>
    %37 = tpu.matmul %36, %34, %cst_22 {dimension_numbers = #tpu.dot_dimension_numbers<[1], [0], [0], [1], [0, 0, 1, 1], [], []>} : vector<8x32xf32>, vector<32x128xf32>, vector<8x128xf32> -> vector<8x128xf32>
    %38 = vector.broadcast %35 : vector<1x128xf32> to vector<8x128xf32>
    %39 = arith.addf %37, %38 : vector<8x128xf32>
    %c0_23 = arith.constant 0 : index
    %c0_24 = arith.constant 0 : index
    %40 = vector.load %arg3[%c0_23, %c0_24] : memref<8x128xf32, #tpu.memory_space<vmem>>, vector<8x128xf32>
    tpu.vector_store %arg3[%c0_23, %c0_24], %39 {strides = array<i32>} : memref<8x128xf32, #tpu.memory_space<vmem>>, vector<8x128xf32>,
    return
  }
  func.func @transform_0(%arg0: i32) -> (i32, i32) {
    %c0_i32 = arith.constant 0 : i32
    %c0_i32_0 = arith.constant 0 : i32
    return %arg0, %c0_i32 : i32, i32
  }
  func.func @transform_1(%arg0: i32) -> (i32, i32) {
    %c0_i32 = arith.constant 0 : i32
    %c0_i32_0 = arith.constant 0 : i32
    %c0_i32_1 = arith.constant 0 : i32
    return %c0_i32, %c0_i32_0 : i32, i32
  }
  func.func @transform_2(%arg0: i32) -> (i32, i32) {
    %c0_i32 = arith.constant 0 : i32
    %c0_i32_0 = arith.constant 0 : i32
    return %arg0, %c0_i32 : i32, i32
  }
}

</mosaic_0001>

<llo_original>
// kernel: darts_graphnet_forward.1
$region0: #{darts_graphnet_forward.1}
  #allocation0 [shape = 'u32[]', space=smem, size = 0x4, offset = 0x4, fixed_abs, tag = 'smem constant byte address 0x4 - core index']
  #allocation1 [shape = 'u32[144,128]{1,0:T(1,128)}', space=vmem, size = 0x12000, scoped, tag = 'internal scratch']
  %s0 = inlined_call_operand.vmem [shape: f32[128,32], index: 0, kind: input, shape index: {}]
  %s1 = inlined_call_operand.hbm [shape: f32[376,128], index: 1, kind: input, shape index: {}]
  %s2 = inlined_call_operand.vmem [shape: f32[8,128], index: 2, kind: output, shape index: {}]
  %s3 = sld [smem:[#allocation0]]
  $region22: #{darts_graphnet_forward.1} parent=0
    _
  %s5 = ssub.s32 1, %s3
  %s6 = scalar_select 0, %s5, %s3
  $region1: #{darts_graphnet_forward.1} parent=0
    #allocation2 [shape = 'u8[192512]{0}', space=vmem, size = 0x2f000, scoped, tag = 'input window, operand 1, single buffered']
    #allocation3 [shape = 's32[1]{0}', space=sflag, size = 0x4, scoped, tag = 'scoped memory for darts_graphnet_forward.1']
    %7 = vsyncpa [#allocation3], 0
    // Predicated region
    $region2: #{darts_graphnet_forward.1} parent=1 // pred_check
      _
    $region3: #{darts_graphnet_forward.1} parent=1 // pred_check_branch
      %9 = sbr.rel (0) target = $region5
    $region4: #{darts_graphnet_forward.1} parent=1 // pred_region
      _
    $region5: #{darts_graphnet_forward.1} parent=1 // pred_fallthru
      _
    // Predicated region
    $region6: #{darts_graphnet_forward.1} parent=1 // pred_check
      _
    $region7: #{darts_graphnet_forward.1} parent=1 // pred_check_branch
      %11 = sbr.rel (0) target = $region9
    $region8: #{darts_graphnet_forward.1} parent=1 // pred_region
      %s13 = ssub.s32 6016, 6016
      %14 = vsyncadd [#allocation3], %s13
      %s15 = sshll.u32 [#allocation2], 4
      %s16 = int_to_ptr.vmem [resolvable:$true] %s15
      %21 = dma.hbm_to_vmem [thread:$0]  %s1, 6016, %s16, [#allocation3], 128, 128, 8
    $region9: #{darts_graphnet_forward.1} parent=1 // pred_fallthru
      _
    // Predicated region
    $region10: #{darts_graphnet_forward.1} parent=1 // pred_check
      _
    $region11: #{darts_graphnet_forward.1} parent=1 // pred_check_branch
      %23 = sbr.rel (0) target = $region13
    $region12: #{darts_graphnet_forward.1} parent=1 // pred_region
      %24 = dma.done [#allocation3], 6016
    $region13: #{darts_graphnet_forward.1} parent=1 // pred_fallthru
      _
    %v25 = vld [vmem:[%s0] sm:$0xff]
    %v26 = vld [vmem:[%s0 + $0x8] sm:$0xff]
    %v27 = vld [vmem:[%s0 + $0x10] sm:$0xff]
    %v28 = vld [vmem:[%s0 + $0x18] sm:$0xff]
    %v29 = vld [vmem:[%s0 + $0x20] sm:$0xff]
    %v30 = vld [vmem:[%s0 + $0x28] sm:$0xff]
    %v31 = vld [vmem:[%s0 + $0x30] sm:$0xff]
    %v32 = vld [vmem:[%s0 + $0x38] sm:$0xff]
    %v33 = vld [vmem:[%s0 + $0x40] sm:$0xff]
    %v34 = vld [vmem:[%s0 + $0x48] sm:$0xff]
    %v35 = vld [vmem:[%s0 + $0x50] sm:$0xff]
    %v36 = vld [vmem:[%s0 + $0x58] sm:$0xff]
    %v37 = vld [vmem:[%s0 + $0x60] sm:$0xff]
    %v38 = vld [vmem:[%s0 + $0x68] sm:$0xff]
    %v39 = vld [vmem:[%s0 + $0x70] sm:$0xff]
    %v40 = vld [vmem:[%s0 + $0x78] sm:$0xff]
    %v41 = vld [vmem:[#allocation2 + $0xf8] sm:$0xff]
    %v42 = vld [vmem:[#allocation2 + $0x100] sm:$0xff]
    %v43 = vld [vmem:[#allocation2 + $0x108] sm:$0xff]
    %v44 = vld [vmem:[#allocation2 + $0x110] sm:$0xff]
    %v45 = vld [vmem:[#allocation2 + $0x118] sm:$0xff]
    %v46 = vld [vmem:[#allocation2 + $0x120] sm:$0xff]
    %v47 = vld [vmem:[#allocation2 + $0x128] sm:$0xff]
    %v48 = vld [vmem:[#allocation2 + $0x130] sm:$0xff]
    %v49 = vld [vmem:[#allocation2 + $0x138] sm:$0xff]
    %v50 = vld [vmem:[#allocation2 + $0x140] sm:$0xff]
    %v51 = vld [vmem:[#allocation2 + $0x148] sm:$0xff]
    %v52 = vld [vmem:[#allocation2 + $0x150] sm:$0xff]
    %v53 = vld [vmem:[#allocation2 + $0x158] sm:$0xff]
    %v54 = vld [vmem:[#allocation2 + $0x160] sm:$0xff]
    %v55 = vld [vmem:[#allocation2 + $0x168] sm:$0xff]
    %v56 = vld [vmem:[#allocation2 + $0x170] sm:$0xff]
    %v57 = vld [vmem:[#allocation2 + $0xc0] sm:$0xff]
    %v58 = vld [vmem:[#allocation2] sm:$0xff]
    %v59 = vld [vmem:[#allocation2 + $0x8] sm:$0xff]
    %v60 = vld [vmem:[#allocation2 + $0x10] sm:$0xff]
    %v61 = vld [vmem:[#allocation2 + $0x18] sm:$0xff]
    %v62 = vld [vmem:[#allocation2 + $0x20] sm:$0xff]
    %v63 = vld [vmem:[#allocation2 + $0x28] sm:$0xff]
    %v64 = vld [vmem:[#allocation2 + $0x30] sm:$0xff]
    %v65 = vld [vmem:[#allocation2 + $0x38] sm:$0xff]
    %vm66 = vcmask 261120
    %v68 = vsel %vm66, %v25, 0
    %v71 = vsel %vm66, %v26, 0
    %v74 = vsel %vm66, %v27, 0
    %v77 = vsel %vm66, %v28, 0
    %v80 = vsel %vm66, %v29, 0
    %v83 = vsel %vm66, %v30, 0
    %v86 = vsel %vm66, %v31, 0
    %v89 = vsel %vm66, %v32, 0
    %v92 = vsel %vm66, %v33, 0
    %v95 = vsel %vm66, %v34, 0
    %v98 = vsel %vm66, %v35, 0
    %v101 = vsel %vm66, %v36, 0
    %v104 = vsel %vm66, %v37, 0
    %v107 = vsel %vm66, %v38, 0
    %v110 = vsel %vm66, %v39, 0
    %v113 = vsel %vm66, %v40, 0
    %115 = vmatprep.subr.mxu0 0.0
    %116 = vmatpush1.msra.mxu0 %v58
    %117 = vmatprep.subr.mxu0 0.0
    %118 = vmatpush1.msra.mxu0 %v59
    %119 = vmatprep.subr.mxu0 0.0
    %120 = vmatpush1.msra.mxu0 %v60
    %121 = vmatprep.subr.mxu0 0.0
    %122 = vmatpush1.msra.mxu0 %v61
    %123 = vmatprep.subr.mxu0 0.0
    %124 = vmatpush1.msra.mxu0 0.0
    %125 = vmatprep.subr.mxu0 0.0
    %126 = vmatpush1.msra.mxu0 0.0
    %127 = vmatprep.subr.mxu0 0.0
    %128 = vmatpush1.msra.mxu0 0.0
    %129 = vmatprep.subr.mxu0 0.0
    %130 = vmatpush1.msra.mxu0 0.0
    %131 = vmatprep.subr.mxu0 0.0
    %132 = vmatpush1.msra.mxu0 0.0
    %133 = vmatprep.subr.mxu0 0.0
    %134 = vmatpush1.msra.mxu0 0.0
    %135 = vmatprep.subr.mxu0 0.0
    %136 = vmatpush1.msra.mxu0 0.0
    %137 = vmatprep.subr.mxu0 0.0
    %138 = vmatpush1.msra.mxu0 0.0
    %139 = vmatprep.subr.mxu0 0.0
    %140 = vmatpush1.msra.mxu0 0.0
    %141 = vmatprep.subr.mxu0 0.0
    %142 = vmatpush1.msra.mxu0 0.0
    %143 = vmatprep.subr.mxu0 0.0
    %144 = vmatpush1.msra.mxu0 0.0
    %145 = vmatprep.subr.mxu0 0.0
    %146 = vmatpush1.msra.mxu0 0.0
    %147 = vmatprep.subr.mxu0 0.0
    %148 = vmatpush1.msra.mxu0 0.0
    %149 = vmatprep.subr.mxu0 0.0
    %150 = vmatpush1.msra.mxu0 0.0
    %151 = vmatprep.subr.mxu0 0.0
    %152 = vmatpush1.msra.mxu0 0.0
    %153 = vmatprep.subr.mxu0 0.0
    %154 = vmatpush1.msra.mxu0 0.0
    %155 = vmatprep.subr.mxu0 0.0
    %156 = vmatpush1.msra.mxu0 0.0
    %157 = vmatprep.subr.mxu0 0.0
    %158 = vmatpush1.msra.mxu0 0.0
    %159 = vmatprep.subr.mxu0 0.0
    %160 = vmatpush1.msra.mxu0 0.0
    %161 = vmatprep.subr.mxu0 0.0
    %162 = vmatpush1.msra.mxu0 0.0
    %163 = vmatprep.subr.mxu0 0.0
    %164 = vmatpush1.msra.mxu0 0.0
    %165 = vmatprep.subr.mxu0 0.0
    %166 = vmatpush1.msra.mxu0 0.0
    %167 = vmatprep.subr.mxu0 0.0
    %168 = vmatpush1.msra.mxu0 0.0
    %169 = vmatprep.subr.mxu0 0.0
    %170 = vmatpush1.msra.mxu0 0.0
    %171 = vmatprep.subr.mxu0 0.0
    %172 = vmatpush1.msra.mxu0 0.0
    %173 = vmatprep.subr.mxu0 0.0
    %174 = vmatpush1.msra.mxu0 0.0
    %175 = vmatprep.subr.mxu0 0.0
    %176 = vmatpush1.msra.mxu0 0.0
    %177 = vmatprep.subr.mxu0 0.0
    %178 = vmatpush1.msra.mxu0 0.0
    %179 = vmatprep.mubr.f32.mxu0 0.0
    %180 = vmatmul.mubr.f32.gmra.mrb[0].mxu0 %v68
    %v181 = vpop.f32.mrb[0].mxu0
    %v182 = vadd.f32 0.0, %v181
    %v183 = vpop.f32.mrb[0].mxu0
    %184 = vmatprep.mubr.f32.mxu0 0.0
    %185 = vmatmul.mubr.f32.gmra.mrb[0].mxu0 %v71
    %v186 = vpop.f32.mrb[0].mxu0
    %v187 = vadd.f32 0.0, %v186
    %v188 = vpop.f32.mrb[0].mxu0
    %189 = vmatprep.mubr.f32.mxu0 0.0
    %190 = vmatmul.mubr.f32.gmra.mrb[0].mxu0 %v74
    %v191 = vpop.f32.mrb[0].mxu0
    %v192 = vadd.f32 0.0, %v191
    %v193 = vpop.f32.mrb[0].mxu0
    %194 = vmatprep.mubr.f32.mxu0 0.0
    %195 = vmatmul.mubr.f32.gmra.mrb[0].mxu0 %v77
    %v196 = vpop.f32.mrb[0].mxu0
    %v197 = vadd.f32 0.0, %v196
    %v198 = vpop.f32.mrb[0].mxu0
    %199 = vmatprep.mubr.f32.mxu0 0.0
    %200 = vmatmul.mubr.f32.gmra.mrb[0].mxu0 %v80
    %v201 = vpop.f32.mrb[0].mxu0
    %v202 = vadd.f32 0.0, %v201
    %v203 = vpop.f32.mrb[0].mxu0
    %204 = vmatprep.mubr.f32.mxu0 0.0
    %205 = vmatmul.mubr.f32.gmra.mrb[0].mxu0 %v83
    %v206 = vpop.f32.mrb[0].mxu0
    %v207 = vadd.f32 0.0, %v206
    %v208 = vpop.f32.mrb[0].mxu0
    %209 = vmatprep.mubr.f32.mxu0 0.0
    %210 = vmatmul.mubr.f32.gmra.mrb[0].mxu0 %v86
    %v211 = vpop.f32.mrb[0].mxu0
    %v212 = vadd.f32 0.0, %v211
    %v213 = vpop.f32.mrb[0].mxu0
    %214 = vmatprep.mubr.f32.mxu0 0.0
    %215 = vmatmul.mubr.f32.gmra.mrb[0].mxu0 %v89
    %v216 = vpop.f32.mrb[0].mxu0
    %v217 = vadd.f32 0.0, %v216
    %v218 = vpop.f32.mrb[0].mxu0
    %219 = vmatprep.mubr.f32.mxu0 0.0
    %220 = vmatmul.mubr.f32.gmra.mrb[0].mxu0 %v92
    %v221 = vpop.f32.mrb[0].mxu0
    %v222 = vadd.f32 0.0, %v221
    %v223 = vpop.f32.mrb[0].mxu0
    %224 = vmatprep.mubr.f32.mxu0 0.0
    %225 = vmatmul.mubr.f32.gmra.mrb[0].mxu0 %v95
    %v226 = vpop.f32.mrb[0].mxu0
    %v227 = vadd.f32 0.0, %v226
    %v228 = vpop.f32.mrb[0].mxu0
    %229 = vmatprep.mubr.f32.mxu0 0.0
    %230 = vmatmul.mubr.f32.gmra.mrb[0].mxu0 %v98
    %v231 = vpop.f32.mrb[0].mxu0
    %v232 = vadd.f32 0.0, %v231
    %v233 = vpop.f32.mrb[0].mxu0
    %234 = vmatprep.mubr.f32.mxu0 0.0
    %235 = vmatmul.mubr.f32.gmra.mrb[0].mxu0 %v101
    %v236 = vpop.f32.mrb[0].mxu0
    %v237 = vadd.f32 0.0, %v236
    %v238 = vpop.f32.mrb[0].mxu0
    %239 = vmatprep.mubr.f32.mxu0 0.0
    %240 = vmatmul.mubr.f32.gmra.mrb[0].mxu0 %v104
    %v241 = vpop.f32.mrb[0].mxu0
    %v242 = vadd.f32 0.0, %v241
    %v243 = vpop.f32.mrb[0].mxu0
    %244 = vmatprep.mubr.f32.mxu0 0.0
    %245 = vmatmul.mubr.f32.gmra.mrb[0].mxu0 %v107
    %v246 = vpop.f32.mrb[0].mxu0
    %v247 = vadd.f32 0.0, %v246
    %v248 = vpop.f32.mrb[0].mxu0
    %249 = vmatprep.mubr.f32.mxu0 0.0
    %250 = vmatmul.mubr.f32.gmra.mrb[0].mxu0 %v110
    %v251 = vpop.f32.mrb[0].mxu0
    %v252 = vadd.f32 0.0, %v251
    %v253 = vpop.f32.mrb[0].mxu0
    %254 = vmatprep.mubr.f32.mxu0 0.0
    %255 = vmatmul.mubr.f32.gmra.mrb[0].mxu0 %v113
    %v256 = vpop.f32.mrb[0].mxu0
    %v257 = vadd.f32 0.0, %v256
    %v258 = vpop.f32.mrb[0].mxu0
    %259 = vdwg.mxu0
    %260 = vmatprep.subr.mxu0 0.0
    %261 = vmatpush1.msra.mxu0 %v62
    %262 = vmatprep.subr.mxu0 0.0
    %263 = vmatpush1.msra.mxu0 %v63
    %264 = vmatprep.subr.mxu0 0.0
    %265 = vmatpush1.msra.mxu0 %v64
    %266 = vmatprep.subr.mxu0 0.0
    %267 = vmatpush1.msra.mxu0 %v65
    %268 = vmatprep.subr.mxu0 0.0
    %269 = vmatpush1.msra.mxu0 0.0
    %270 = vmatprep.subr.mxu0 0.0
    %271 = vmatpush1.msra.mxu0 0.0
    %272 = vmatprep.subr.mxu0 0.0
    %273 = vmatpush1.msra.mxu0 0.0
    %274 = vmatprep.subr.mxu0 0.0
    %275 = vmatpush1.msra.mxu0 0.0
    %276 = vmatprep.subr.mxu0 0.0
    %277 = vmatpush1.msra.mxu0 0.0
    %278 = vmatprep.subr.mxu0 0.0
    %279 = vmatpush1.msra.mxu0 0.0
    %280 = vmatprep.subr.mxu0 0.0
    %281 = vmatpush1.msra.mxu0 0.0
    %282 = vmatprep.subr.mxu0 0.0
    %283 = vmatpush1.msra.mxu0 0.0
    %284 = vmatprep.subr.mxu0 0.0
    %285 = vmatpush1.msra.mxu0 0.0
    %286 = vmatprep.subr.mxu0 0.0
    %287 = vmatpush1.msra.mxu0 0.0
    %288 = vmatprep.subr.mxu0 0.0
    %289 = vmatpush1.msra.mxu0 0.0
    %290 = vmatprep.subr.mxu0 0.0
    %291 = vmatpush1.msra.mxu0 0.0
    %292 = vmatprep.subr.mxu0 0.0
    %293 = vmatpush1.msra.mxu0 0.0
    %294 = vmatprep.subr.mxu0 0.0
    %295 = vmatpush1.msra.mxu0 0.0
    %296 = vmatprep.subr.mxu0 0.0
    %297 = vmatpush1.msra.mxu0 0.0
    %298 = vmatprep.subr.mxu0 0.0
    %299 = vmatpush1.msra.mxu0 0.0
    %300 = vmatprep.subr.mxu0 0.0
    %301 = vmatpush1.msra.mxu0 0.0
    %302 = vmatprep.subr.mxu0 0.0
    %303 = vmatpush1.msra.mxu0 0.0
    %304 = vmatprep.subr.mxu0 0.0
    %305 = vmatpush1.msra.mxu0 0.0
    %306 = vmatprep.subr.mxu0 0.0
    %307 = vmatpush1.msra.mxu0 0.0
    %308 = vmatprep.subr.mxu0 0.0
    %309 = vmatpush1.msra.mxu0 0.0
    %310 = vmatprep.subr.mxu0 0.0
    %311 = vmatpush1.msra.mxu0 0.0
    %312 = vmatprep.subr.mxu0 0.0
    %313 = vmatpush1.msra.mxu0 0.0
    %314 = vmatprep.subr.mxu0 0.0
    %315 = vmatpush1.msra.mxu0 0.0
    %316 = vmatprep.subr.mxu0 0.0
    %317 = vmatpush1.msra.mxu0 0.0
    %318 = vmatprep.subr.mxu0 0.0
    %319 = vmatpush1.msra.mxu0 0.0
    %320 = vmatprep.subr.mxu0 0.0
    %321 = vmatpush1.msra.mxu0 0.0
    %322 = vmatprep.subr.mxu0 0.0
    %323 = vmatpush1.msra.mxu0 0.0
    %324 = vmatprep.mubr.f32.mxu0 0.0
    %325 = vmatmul.mubr.f32.gmra.mrb[0].mxu0 %v68
    %v326 = vpop.f32.mrb[0].mxu0
    %v327 = vadd.f32 0.0, %v326
    %v328 = vpop.f32.mrb[0].mxu0
    %329 = vmatprep.mubr.f32.mxu0 0.0
    %330 = vmatmul.mubr.f32.gmra.mrb[0].mxu0 %v71
    %v331 = vpop.f32.mrb[0].mxu0
    %v332 = vadd.f32 0.0, %v331
    %v333 = vpop.f32.mrb[0].mxu0
    %334 = vmatprep.mubr.f32.mxu0 0.0
    %335 = vmatmul.mubr.f32.gmra.mrb[0].mxu0 %v74
    %v336 = vpop.f32.mrb[0].mxu0
    %v337 = vadd.f32 0.0, %v336
    %v338 = vpop.f32.mrb[0].mxu0
    %339 = vmatprep.mubr.f32.mxu0 0.0
    %340 = vmatmul.mubr.f32.gmra.mrb[0].mxu0 %v77
    %v341 = vpop.f32.mrb[0].mxu0
    %v342 = vadd.f32 0.0, %v341
    %v343 = vpop.f32.mrb[0].mxu0
    %344 = vmatprep.mubr.f32.mxu0 0.0
    %345 = vmatmul.mubr.f32.gmra.mrb[0].mxu0 %v80
    %v346 = vpop.f32.mrb[0].mxu0
    %v347 = vadd.f32 0.0, %v346
    %v348 = vpop.f32.mrb[0].mxu0
    %349 = vmatprep.mubr.f32.mxu0 0.0
    %350 = vmatmul.mubr.f32.gmra.mrb[0].mxu0 %v83
    %v351 = vpop.f32.mrb[0].mxu0
    %v352 = vadd.f32 0.0, %v351
    %v353 = vpop.f32.mrb[0].mxu0
    %354 = vmatprep.mubr.f32.mxu0 0.0
    %355 = vmatmul.mubr.f32.gmra.mrb[0].mxu0 %v86
    %v356 = vpop.f32.mrb[0].mxu0
    %v357 = vadd.f32 0.0, %v356
    %v358 = vpop.f32.mrb[0].mxu0
    %359 = vmatprep.mubr.f32.mxu0 0.0
    %360 = vmatmul.mubr.f32.gmra.mrb[0].mxu0 %v89
    %v361 = vpop.f32.mrb[0].mxu0
    %v362 = vadd.f32 0.0, %v361
    %v363 = vpop.f32.mrb[0].mxu0
    %364 = vmatprep.mubr.f32.mxu0 0.0
    %365 = vmatmul.mubr.f32.gmra.mrb[0].mxu0 %v92
    %v366 = vpop.f32.mrb[0].mxu0
    %v367 = vadd.f32 0.0, %v366
    %v368 = vpop.f32.mrb[0].mxu0
    %369 = vmatprep.mubr.f32.mxu0 0.0
    %370 = vmatmul.mubr.f32.gmra.mrb[0].mxu0 %v95
    %v371 = vpop.f32.mrb[0].mxu0
    %v372 = vadd.f32 0.0, %v371
    %v373 = vpop.f32.mrb[0].mxu0
    %374 = vmatprep.mubr.f32.mxu0 0.0
    %375 = vmatmul.mubr.f32.gmra.mrb[0].mxu0 %v98
    %v376 = vpop.f32.mrb[0].mxu0
    %v377 = vadd.f32 0.0, %v376
    %v378 = vpop.f32.mrb[0].mxu0
    %379 = vmatprep.mubr.f32.mxu0 0.0
    %380 = vmatmul.mubr.f32.gmra.mrb[0].mxu0 %v101
    %v381 = vpop.f32.mrb[0].mxu0
    %v382 = vadd.f32 0.0, %v381
    %v383 = vpop.f32.mrb[0].mxu0
    %384 = vmatprep.mubr.f32.mxu0 0.0
    %385 = vmatmul.mubr.f32.gmra.mrb[0].mxu0 %v104
    %v386 = vpop.f32.mrb[0].mxu0
    %v387 = vadd.f32 0.0, %v386
    %v388 = vpop.f32.mrb[0].mxu0
    %389 = vmatprep.mubr.f32.mxu0 0.0
    %390 = vmatmul.mubr.f32.gmra.mrb[0].mxu0 %v107
    %v391 = vpop.f32.mrb[0].mxu0
    %v392 = vadd.f32 0.0, %v391
    %v393 = vpop.f32.mrb[0].mxu0
    %394 = vmatprep.mubr.f32.mxu0 0.0
    %395 = vmatmul.mubr.f32.gmra.mrb[0].mxu0 %v110
    %v396 = vpop.f32.mrb[0].mxu0
    %v397 = vadd.f32 0.0, %v396
    %v398 = vpop.f32.mrb[0].mxu0
    %399 = vmatprep.mubr.f32.mxu0 0.0
    %400 = vmatmul.mubr.f32.gmra.mrb[0].mxu0 %v113
    %v401 = vpop.f32.mrb[0].mxu0
    %v402 = vadd.f32 0.0, %v401
    %v403 = vpop.f32.mrb[0].mxu0
    %404 = vdwg.mxu0
    %405 = vmatprep.subr.mxu0 0.0
    %406 = vmatpush1.msra.mxu0 %v182
    %407 = vmatprep.subr.mxu0 0.0
    %408 = vmatpush1.msra.mxu0 %v187
    %409 = vmatprep.subr.mxu0 0.0
    %410 = vmatpush1.msra.mxu0 %v192
    %411 = vmatprep.subr.mxu0 0.0
    %412 = vmatpush1.msra.mxu0 %v197
    %413 = vmatprep.subr.mxu0 0.0
    %414 = vmatpush1.msra.mxu0 %v202
    %415 = vmatprep.subr.mxu0 0.0
    %416 = vmatpush1.msra.mxu0 %v207
    %417 = vmatprep.subr.mxu0 0.0
    %418 = vmatpush1.msra.mxu0 %v212
    %419 = vmatprep.subr.mxu0 0.0
    %420 = vmatpush1.msra.mxu0 %v217
    %421 = vmatprep.subr.mxu0 0.0
    %422 = vmatpush1.msra.mxu0 %v222
    %423 = vmatprep.subr.mxu0 0.0
    %424 = vmatpush1.msra.mxu0 %v227
    %425 = vmatprep.subr.mxu0 0.0
    %426 = vmatpush1.msra.mxu0 %v232
    %427 = vmatprep.subr.mxu0 0.0
    %428 = vmatpush1.msra.mxu0 %v237
    %429 = vmatprep.subr.mxu0 0.0
    %430 = vmatpush1.msra.mxu0 %v242
    %431 = vmatprep.subr.mxu0 0.0
    %432 = vmatpush1.msra.mxu0 %v247
    %433 = vmatprep.subr.mxu0 0.0
    %434 = vmatpush1.msra.mxu0 %v252
    %435 = vmatprep.subr.mxu0 0.0
    %436 = vmatpush1.msra.mxu0 %v257
    %437 = vmatprep.subr.mxu0 0.0
    %438 = vmatpush1.msra.mxu0 0.0
    %439 = vmatprep.subr.mxu0 0.0
    %440 = vmatpush1.msra.mxu0 0.0
    %441 = vmatprep.subr.mxu0 0.0
    %442 = vmatpush1.msra.mxu0 0.0
    %443 = vmatprep.subr.mxu0 0.0
    %444 = vmatpush1.msra.mxu0 0.0
    %445 = vmatprep.subr.mxu0 0.0
    %446 = vmatpush1.msra.mxu0 0.0
    %447 = vmatprep.subr.mxu0 0.0
    %448 = vmatpush1.msra.mxu0 0.0
    %449 = vmatprep.subr.mxu0 0.0
    %450 = vmatpush1.msra.mxu0 0.0
    %451 = vmatprep.subr.mxu0 0.0
    %452 = vmatpush1.msra.mxu0 0.0
    %453 = vmatprep.subr.mxu0 0.0
    %454 = vmatpush1.msra.mxu0 0.0
    %455 = vmatprep.subr.mxu0 0.0
    %456 = vmatpush1.msra.mxu0 0.0
    %457 = vmatprep.subr.mxu0 0.0
    %458 = vmatpush1.msra.mxu0 0.0
    %459 = vmatprep.subr.mxu0 0.0
    %460 = vmatpush1.msra.mxu0 0.0
    %461 = vmatprep.subr.mxu0 0.0
    %462 = vmatpush1.msra.mxu0 0.0
    %463 = vmatprep.subr.mxu0 0.0
    %464 = vmatpush1.msra.mxu0 0.0
    %465 = vmatprep.subr.mxu0 0.0
    %466 = vmatpush1.msra.mxu0 0.0
    %467 = vmatprep.subr.mxu0 0.0
    %468 = vmatpush1.msra.mxu0 0.0
    %469 = vmatprep.mubr.f32.mxu0 0.0
    %470 = vmatmul.mubr.f32.gmra.mrb[0].mxu0 %v41
    %v471 = vpop.f32.mrb[0].mxu0
    %v472 = vadd.f32 %v327, %v471
    %v473 = vpop.f32.mrb[0].mxu0
    %474 = vmatprep.mubr.f32.mxu0 0.0
    %475 = vmatmul.mubr.f32.gmra.mrb[0].mxu0 %v42
    %v476 = vpop.f32.mrb[0].mxu0
    %v477 = vadd.f32 %v332, %v476
    %v478 = vpop.f32.mrb[0].mxu0
    %479 = vmatprep.mubr.f32.mxu0 0.0
    %480 = vmatmul.mubr.f32.gmra.mrb[0].mxu0 %v43
    %v481 = vpop.f32.mrb[0].mxu0
    %v482 = vadd.f32 %v337, %v481
    %v483 = vpop.f32.mrb[0].mxu0
    %484 = vmatprep.mubr.f32.mxu0 0.0
    %485 = vmatmul.mubr.f32.gmra.mrb[0].mxu0 %v44
    %v486 = vpop.f32.mrb[0].mxu0
    %v487 = vadd.f32 %v342, %v486
    %v488 = vpop.f32.mrb[0].mxu0
    %489 = vmatprep.mubr.f32.mxu0 0.0
    %490 = vmatmul.mubr.f32.gmra.mrb[0].mxu0 %v45
    %v491 = vpop.f32.mrb[0].mxu0
    %v492 = vadd.f32 %v347, %v491
    %v493 = vpop.f32.mrb[0].mxu0
    %494 = vmatprep.mubr.f32.mxu0 0.0
    %495 = vmatmul.mubr.f32.gmra.mrb[0].mxu0 %v46
    %v496 = vpop.f32.mrb[0].mxu0
    %v497 = vadd.f32 %v352, %v496
    %v498 = vpop.f32.mrb[0].mxu0
    %499 = vmatprep.mubr.f32.mxu0 0.0
    %500 = vmatmul.mubr.f32.gmra.mrb[0].mxu0 %v47
    %v501 = vpop.f32.mrb[0].mxu0
    %v502 = vadd.f32 %v357, %v501
    %v503 = vpop.f32.mrb[0].mxu0
    %504 = vmatprep.mubr.f32.mxu0 0.0
    %505 = vmatmul.mubr.f32.gmra.mrb[0].mxu0 %v48
    %v506 = vpop.f32.mrb[0].mxu0
    %v507 = vadd.f32 %v362, %v506
    %v508 = vpop.f32.mrb[0].mxu0
    %509 = vmatprep.mubr.f32.mxu0 0.0
    %510 = vmatmul.mubr.f32.gmra.mrb[0].mxu0 %v49
    %v511 = vpop.f32.mrb[0].mxu0
    %v512 = vadd.f32 %v367, %v511
    %v513 = vpop.f32.mrb[0].mxu0
    %514 = vmatprep.mubr.f32.mxu0 0.0
    %515 = vmatmul.mubr.f32.gmra.mrb[0].mxu0 %v50
    %v516 = vpop.f32.mrb[0].mxu0
    %v517 = vadd.f32 %v372, %v516
    %v518 = vpop.f32.mrb[0].mxu0
    %519 = vmatprep.mubr.f32.mxu0 0.0
    %520 = vmatmul.mubr.f32.gmra.mrb[0].mxu0 %v51
    %v521 = vpop.f32.mrb[0].mxu0
    %v522 = vadd.f32 %v377, %v521
    %v523 = vpop.f32.mrb[0].mxu0
    %524 = vmatprep.mubr.f32.mxu0 0.0
    %525 = vmatmul.mubr.f32.gmra.mrb[0].mxu0 %v52
    %v526 = vpop.f32.mrb[0].mxu0
    %v527 = vadd.f32 %v382, %v526
    %v528 = vpop.f32.mrb[0].mxu0
    %529 = vmatprep.mubr.f32.mxu0 0.0
    %530 = vmatmul.mubr.f32.gmra.mrb[0].mxu0 %v53
    %v531 = vpop.f32.mrb[0].mxu0
    %v532 = vadd.f32 %v387, %v531
    %v533 = vpop.f32.mrb[0].mxu0
    %534 = vmatprep.mubr.f32.mxu0 0.0
    %535 = vmatmul.mubr.f32.gmra.mrb[0].mxu0 %v54
    %v536 = vpop.f32.mrb[0].mxu0
    %v537 = vadd.f32 %v392, %v536
    %v538 = vpop.f32.mrb[0].mxu0
    %539 = vmatprep.mubr.f32.mxu0 0.0
    %540 = vmatmul.mubr.f32.gmra.mrb[0].mxu0 %v55
    %v541 = vpop.f32.mrb[0].mxu0
    %v542 = vadd.f32 %v397, %v541
    %v543 = vpop.f32.mrb[0].mxu0
    %544 = vmatprep.mubr.f32.mxu0 0.0
    %545 = vmatmul.mubr.f32.gmra.mrb[0].mxu0 %v56
    %v546 = vpop.f32.mrb[0].mxu0
    %v547 = vadd.f32 %v402, %v546
    %v548 = vpop.f32.mrb[0].mxu0
    %549 = vdwg.mxu0
    %v550 = vlaneseq
    %v551 = vshrl.u32 %v550, 7
    %v552 = vsub.s32 0, %v551
    %v553 = vrot.slane %v57, %v552
    %v554 = vadd.f32 %v472, %v553
    %v555 = vadd.f32 %v477, %v553
    %v556 = vadd.f32 %v482, %v553
    %v557 = vadd.f32 %v487, %v553
    %v558 = vadd.f32 %v492, %v553
    %v559 = vadd.f32 %v497, %v553
    %v560 = vadd.f32 %v502, %v553
    %v561 = vadd.f32 %v507, %v553
    %v562 = vadd.f32 %v512, %v553
    %v563 = vadd.f32 %v517, %v553
    %v564 = vadd.f32 %v522, %v553
    %v565 = vadd.f32 %v527, %v553
    %v566 = vadd.f32 %v532, %v553
    %v567 = vadd.f32 %v537, %v553
    %v568 = vadd.f32 %v542, %v553
    %v569 = vadd.f32 %v547, %v553
    %v570 = vld [vmem:[#allocation2 + $0x40] sm:$0xff]
    %v571 = vld [vmem:[#allocation2 + $0x48] sm:$0xff]
    %v572 = vld [vmem:[#allocation2 + $0x50] sm:$0xff]
    %v573 = vld [vmem:[#allocation2 + $0x58] sm:$0xff]
    %v574 = vld [vmem:[#allocation2 + $0x60] sm:$0xff]
    %v575 = vld [vmem:[#allocation2 + $0x68] sm:$0xff]
    %v576 = vld [vmem:[#allocation2 + $0x70] sm:$0xff]
    %v577 = vld [vmem:[#allocation2 + $0x78] sm:$0xff]
    %v579 = vsel %vm66, %v554, 0
    %v582 = vsel %vm66, %v555, 0
    %v585 = vsel %vm66, %v556, 0
    %v588 = vsel %vm66, %v557, 0
    %v591 = vsel %vm66, %v558, 0
    %v594 = vsel %vm66, %v559, 0
    %v597 = vsel %vm66, %v560, 0
    %v600 = vsel %vm66, %v561, 0
    %v603 = vsel %vm66, %v562, 0
    %v606 = vsel %vm66, %v563, 0
    %v609 = vsel %vm66, %v564, 0
    %v612 = vsel %vm66, %v565, 0
    %v615 = vsel %vm66, %v566, 0
    %v618 = vsel %vm66, %v567, 0
    %v621 = vsel %vm66, %v568, 0
    %v624 = vsel %vm66, %v569, 0
    %626 = vmatprep.subr.mxu0 0.0
    %627 = vmatpush1.msra.mxu0 %v570
    %628 = vmatprep.subr.mxu0 0.0
    %629 = vmatpush1.msra.mxu0 %v571
    %630 = vmatprep.subr.mxu0 0.0
    %631 = vmatpush1.msra.mxu0 %v572
    %632 = vmatprep.subr.mxu0 0.0
    %633 = vmatpush1.msra.mxu0 %v573
    %634 = vmatprep.subr.mxu0 0.0
    %635 = vmatpush1.msra.mxu0 0.0
    %636 = vmatprep.subr.mxu0 0.0
    %637 = vmatpush1.msra.mxu0 0.0
    %638 = vmatprep.subr.mxu0 0.0
    %639 = vmatpush1.msra.mxu0 0.0
    %640 = vmatprep.subr.mxu0 0.0
    %641 = vmatpush1.msra.mxu0 0.0
    %642 = vmatprep.subr.mxu0 0.0
    %643 = vmatpush1.msra.mxu0 0.0
    %644 = vmatprep.subr.mxu0 0.0
    %645 = vmatpush1.msra.mxu0 0.0
    %646 = vmatprep.subr.mxu0 0.0
    %647 = vmatpush1.msra.mxu0 0.0
    %648 = vmatprep.subr.mxu0 0.0
    %649 = vmatpush1.msra.mxu0 0.0
    %650 = vmatprep.subr.mxu0 0.0
    %651 = vmatpush1.msra.mxu0 0.0
    %652 = vmatprep.subr.mxu0 0.0
    %653 = vmatpush1.msra.mxu0 0.0
    %654 = vmatprep.subr.mxu0 0.0
    %655 = vmatpush1.msra.mxu0 0.0
    %656 = vmatprep.subr.mxu0 0.0
    %657 = vmatpush1.msra.mxu0 0.0
    %658 = vmatprep.subr.mxu0 0.0
    %659 = vmatpush1.msra.mxu0 0.0
    %660 = vmatprep.subr.mxu0 0.0
    %661 = vmatpush1.msra.mxu0 0.0
    %662 = vmatprep.subr.mxu0 0.0
    %663 = vmatpush1.msra.mxu0 0.0
    %664 = vmatprep.subr.mxu0 0.0
    %665 = vmatpush1.msra.mxu0 0.0
    %666 = vmatprep.subr.mxu0 0.0
    %667 = vmatpush1.msra.mxu0 0.0
    %668 = vmatprep.subr.mxu0 0.0
    %669 = vmatpush1.msra.mxu0 0.0
    %670 = vmatprep.subr.mxu0 0.0
    %671 = vmatpush1.msra.mxu0 0.0
    %672 = vmatprep.subr.mxu0 0.0
    %673 = vmatpush1.msra.mxu0 0.0
    %674 = vmatprep.subr.mxu0 0.0
    %675 = vmatpush1.msra.mxu0 0.0
    %676 = vmatprep.subr.mxu0 0.0
    %677 = vmatpush1.msra.mxu0 0.0
    %678 = vmatprep.subr.mxu0 0.0
    %679 = vmatpush1.msra.mxu0 0.0
    %680 = vmatprep.subr.mxu0 0.0
    %681 = vmatpush1.msra.mxu0 0.0
    %682 = vmatprep.subr.mxu0 0.0
    %683 = vmatpush1.msra.mxu0 0.0
    %684 = vmatprep.subr.mxu0 0.0
    %685 = vmatpush1.msra.mxu0 0.0
    %686 = vmatprep.subr.mxu0 0.0
    %687 = vmatpush1.msra.mxu0 0.0
    %688 = vmatprep.subr.mxu0 0.0
    %689 = vmatpush1.msra.mxu0 0.0
    %690 = vmatprep.mubr.f32.mxu0 0.0
    %691 = vmatmul.mubr.f32.gmra.mrb[0].mxu0 %v579
    %v692 = vpop.f32.mrb[0].mxu0
    %v693 = vadd.f32 0.0, %v692
    %v694 = vpop.f32.mrb[0].mxu0
    %695 = vmatprep.mubr.f32.mxu0 0.0
    %696 = vmatmul.mubr.f32.gmra.mrb[0].mxu0 %v582
    %v697 = vpop.f32.mrb[0].mxu0
    %v698 = vadd.f32 0.0, %v697
    %v699 = vpop.f32.mrb[0].mxu0
    %700 = vmatprep.mubr.f32.mxu0 0.0
    %701 = vmatmul.mubr.f32.gmra.mrb[0].mxu0 %v585
    %v702 = vpop.f32.mrb[0].mxu0
    %v703 = vadd.f32 0.0, %v702
    %v704 = vpop.f32.mrb[0].mxu0
    %705 = vmatprep.mubr.f32.mxu0 0.0
    %706 = vmatmul.mubr.f32.gmra.mrb[0].mxu0 %v588
    %v707 = vpop.f32.mrb[0].mxu0
    %v708 = vadd.f32 0.0, %v707
    %v709 = vpop.f32.mrb[0].mxu0
    %710 = vmatprep.mubr.f32.mxu0 0.0
    %711 = vmatmul.mubr.f32.gmra.mrb[0].mxu0 %v591
    %v712 = vpop.f32.mrb[0].mxu0
    %v713 = vadd.f32 0.0, %v712
    %v714 = vpop.f32.mrb[0].mxu0
    %715 = vmatprep.mubr.f32.mxu0 0.0
    %716 = vmatmul.mubr.f32.gmra.mrb[0].mxu0 %v594
    %v717 = vpop.f32.mrb[0].mxu0
    %v718 = vadd.f32 0.0, %v717
    %v719 = vpop.f32.mrb[0].mxu0
    %720 = vmatprep.mubr.f32.mxu0 0.0
    %721 = vmatmul.mubr.f32.gmra.mrb[0].mxu0 %v597
    %v722 = vpop.f32.mrb[0].mxu0
    %v723 = vadd.f32 0.0, %v722
    %v724 = vpop.f32.mrb[0].mxu0
    %725 = vmatprep.mubr.f32.mxu0 0.0
    %726 = vmatmul.mubr.f32.gmra.mrb[0].mxu0 %v600
    %v727 = vpop.f32.mrb[0].mxu0
    %v728 = vadd.f32 0.0, %v727
    %v729 = vpop.f32.mrb[0].mxu0
    %730 = vmatprep.mubr.f32.mxu0 0.0
    %731 = vmatmul.mubr.f32.gmra.mrb[0].mxu0 %v603
    %v732 = vpop.f32.mrb[0].mxu0
    %v733 = vadd.f32 0.0, %v732
    %v734 = vpop.f32.mrb[0].mxu0
    %735 = vmatprep.mubr.f32.mxu0 0.0
    %736 = vmatmul.mubr.f32.gmra.mrb[0].mxu0 %v606
    %v737 = vpop.f32.mrb[0].mxu0
    %v738 = vadd.f32 0.0, %v737
    %v739 = vpop.f32.mrb[0].mxu0
    %740 = vmatprep.mubr.f32.mxu0 0.0
    %741 = vmatmul.mubr.f32.gmra.mrb[0].mxu0 %v609
    %v742 = vpop.f32.mrb[0].mxu0
    %v743 = vadd.f32 0.0, %v742
    %v744 = vpop.f32.mrb[0].mxu0
    %745 = vmatprep.mubr.f32.mxu0 0.0
    %746 = vmatmul.mubr.f32.gmra.mrb[0].mxu0 %v612
    %v747 = vpop.f32.mrb[0].mxu0
    %v748 = vadd.f32 0.0, %v747
    %v749 = vpop.f32.mrb[0].mxu0
    %750 = vmatprep.mubr.f32.mxu0 0.0
    %751 = vmatmul.mubr.f32.gmra.mrb[0].mxu0 %v615
    %v752 = vpop.f32.mrb[0].mxu0
    %v753 = vadd.f32 0.0, %v752
    %v754 = vpop.f32.mrb[0].mxu0
    %755 = vmatprep.mubr.f32.mxu0 0.0
    %756 = vmatmul.mubr.f32.gmra.mrb[0].mxu0 %v618
    %v757 = vpop.f32.mrb[0].mxu0
    %v758 = vadd.f32 0.0, %v757
    %v759 = vpop.f32.mrb[0].mxu0
    %760 = vmatprep.mubr.f32.mxu0 0.0
    %761 = vmatmul.mubr.f32.gmra.mrb[0].mxu0 %v621
    %v762 = vpop.f32.mrb[0].mxu0
    %v763 = vadd.f32 0.0, %v762
    %v764 = vpop.f32.mrb[0].mxu0
    %765 = vmatprep.mubr.f32.mxu0 0.0
    %766 = vmatmul.mubr.f32.gmra.mrb[0].mxu0 %v624
    %v767 = vpop.f32.mrb[0].mxu0
    %v768 = vadd.f32 0.0, %v767
    %v769 = vpop.f32.mrb[0].mxu0
    %770 = vdwg.mxu0
    %771 = vmatprep.subr.mxu0 0.0
    %772 = vmatpush1.msra.mxu0 %v574
    %773 = vmatprep.subr.mxu0 0.0
    %774 = vmatpush1.msra.mxu0 %v575
    %775 = vmatprep.subr.mxu0 0.0
    %776 = vmatpush1.msra.mxu0 %v576
    %777 = vmatprep.subr.mxu0 0.0
    %778 = vmatpush1.msra.mxu0 %v577
    %779 = vmatprep.subr.mxu0 0.0
    %780 = vmatpush1.msra.mxu0 0.0
    %781 = vmatprep.subr.mxu0 0.0
    %782 = vmatpush1.msra.mxu0 0.0
    %783 = vmatprep.subr.mxu0 0.0
    %784 = vmatpush1.msra.mxu0 0.0
    %785 = vmatprep.subr.mxu0 0.0
    %786 = vmatpush1.msra.mxu0 0.0
    %787 = vmatprep.subr.mxu0 0.0
    %788 = vmatpush1.msra.mxu0 0.0
    %789 = vmatprep.subr.mxu0 0.0
    %790 = vmatpush1.msra.mxu0 0.0
    %791 = vmatprep.subr.mxu0 0.0
    %792 = vmatpush1.msra.mxu0 0.0
    %793 = vmatprep.subr.mxu0 0.0
    %794 = vmatpush1.msra.mxu0 0.0
    %795 = vmatprep.subr.mxu0 0.0
    %796 = vmatpush1.msra.mxu0 0.0
    %797 = vmatprep.subr.mxu0 0.0
    %798 = vmatpush1.msra.mxu0 0.0
    %799 = vmatprep.subr.mxu0 0.0
    %800 = vmatpush1.msra.mxu0 0.0
    %801 = vmatprep.subr.mxu0 0.0
    %802 = vmatpush1.msra.mxu0 0.0
    %803 = vmatprep.subr.mxu0 0.0
    %804 = vmatpush1.msra.mxu0 0.0
    %805 = vmatprep.subr.mxu0 0.0
    %806 = vmatpush1.msra.mxu0 0.0
    %807 = vmatprep.subr.mxu0 0.0
    %808 = vmatpush1.msra.mxu0 0.0
    %809 = vmatprep.subr.mxu0 0.0
    %810 = vmatpush1.msra.mxu0 0.0
    %811 = vmatprep.subr.mxu0 0.0
    %812 = vmatpush1.msra.mxu0 0.0
    %813 = vmatprep.subr.mxu0 0.0
    %814 = vmatpush1.msra.mxu0 0.0
    %815 = vmatprep.subr.mxu0 0.0
    %816 = vmatpush1.msra.mxu0 0.0
    %817 = vmatprep.subr.mxu0 0.0
    %818 = vmatpush1.msra.mxu0 0.0
    %819 = vmatprep.subr.mxu0 0.0
    %820 = vmatpush1.msra.mxu0 0.0
    %821 = vmatprep.subr.mxu0 0.0
    %822 = vmatpush1.msra.mxu0 0.0
    %823 = vmatprep.subr.mxu0 0.0
    %824 = vmatpush1.msra.mxu0 0.0
    %825 = vmatprep.subr.mxu0 0.0
    %826 = vmatpush1.msra.mxu0 0.0
    %827 = vmatprep.subr.mxu0 0.0
    %828 = vmatpush1.msra.mxu0 0.0
    %829 = vmatprep.subr.mxu0 0.0
    %830 = vmatpush1.msra.mxu0 0.0
    %831 = vmatprep.subr.mxu0 0.0
    %832 = vmatpush1.msra.mxu0 0.0
    %833 = vmatprep.subr.mxu0 0.0
    %834 = vmatpush1.msra.mxu0 0.0
    %835 = vmatprep.mubr.f32.mxu0 0.0
    %836 = vmatmul.mubr.f32.gmra.mrb[0].mxu0 %v579
    %v837 = vpop.f32.mrb[0].mxu0
    %v838 = vadd.f32 0.0, %v837
    %v839 = vpop.f32.mrb[0].mxu0
    %840 = vmatprep.mubr.f32.mxu0 0.0
    %841 = vmatmul.mubr.f32.gmra.mrb[0].mxu0 %v582
    %v842 = vpop.f32.mrb[0].mxu0
    %v843 = vadd.f32 0.0, %v842
    %v844 = vpop.f32.mrb[0].mxu0
    %845 = vmatprep.mubr.f32.mxu0 0.0
    %846 = vmatmul.mubr.f32.gmra.mrb[0].mxu0 %v585
    %v847 = vpop.f32.mrb[0].mxu0
    %v848 = vadd.f32 0.0, %v847
    %v849 = vpop.f32.mrb[0].mxu0
    %850 = vmatprep.mubr.f32.mxu0 0.0
    %851 = vmatmul.mubr.f32.gmra.mrb[0].mxu0 %v588
    %v852 = vpop.f32.mrb[0].mxu0
    %v853 = vadd.f32 0.0, %v852
    %v854 = vpop.f32.mrb[0].mxu0
    %855 = vmatprep.mubr.f32.mxu0 0.0
    %856 = vmatmul.mubr.f32.gmra.mrb[0].mxu0 %v591
    %v857 = vpop.f32.mrb[0].mxu0
    %v858 = vadd.f32 0.0, %v857
    %v859 = vpop.f32.mrb[0].mxu0
    %860 = vmatprep.mubr.f32.mxu0 0.0
    %861 = vmatmul.mubr.f32.gmra.mrb[0].mxu0 %v594
    %v862 = vpop.f32.mrb[0].mxu0
    %v863 = vadd.f32 0.0, %v862
    %v864 = vpop.f32.mrb[0].mxu0
    %865 = vmatprep.mubr.f32.mxu0 0.0
    %866 = vmatmul.mubr.f32.gmra.mrb[0].mxu0 %v597
    %v867 = vpop.f32.mrb[0].mxu0
    %v868 = vadd.f32 0.0, %v867
    %v869 = vpop.f32.mrb[0].mxu0
    %870 = vmatprep.mubr.f32.mxu0 0.0
    %871 = vmatmul.mubr.f32.gmra.mrb[0].mxu0 %v600
    %v872 = vpop.f32.mrb[0].mxu0
    %v873 = vadd.f32 0.0, %v872
    %v874 = vpop.f32.mrb[0].mxu0
    %875 = vmatprep.mubr.f32.mxu0 0.0
    %876 = vmatmul.mubr.f32.gmra.mrb[0].mxu0 %v603
    %v877 = vpop.f32.mrb[0].mxu0
    %v878 = vadd.f32 0.0, %v877
    %v879 = vpop.f32.mrb[0].mxu0
    %880 = vmatprep.mubr.f32.mxu0 0.0
    %881 = vmatmul.mubr.f32.gmra.mrb[0].mxu0 %v606
    %v882 = vpop.f32.mrb[0].mxu0
    %v883 = vadd.f32 0.0, %v882
    %v884 = vpop.f32.mrb[0].mxu0
    %885 = vmatprep.mubr.f32.mxu0 0.0
    %886 = vmatmul.mubr.f32.gmra.mrb[0].mxu0 %v609
    %v887 = vpop.f32.mrb[0].mxu0
    %v888 = vadd.f32 0.0, %v887
    %v889 = vpop.f32.mrb[0].mxu0
    %890 = vmatprep.mubr.f32.mxu0 0.0
    %891 = vmatmul.mubr.f32.gmra.mrb[0].mxu0 %v612
    %v892 = vpop.f32.mrb[0].mxu0
    %v893 = vadd.f32 0.0, %v892
    %v894 = vpop.f32.mrb[0].mxu0
    %895 = vmatprep.mubr.f32.mxu0 0.0
    %896 = vmatmul.mubr.f32.gmra.mrb[0].mxu0 %v615
    %v897 = vpop.f32.mrb[0].mxu0
    %v898 = vadd.f32 0.0, %v897
    %v899 = vpop.f32.mrb[0].mxu0
    %900 = vmatprep.mubr.f32.mxu0 0.0
    %901 = vmatmul.mubr.f32.gmra.mrb[0].mxu0 %v618
    %v902 = vpop.f32.mrb[0].mxu0
    %v903 = vadd.f32 0.0, %v902
    %v904 = vpop.f32.mrb[0].mxu0
    %905 = vmatprep.mubr.f32.mxu0 0.0
    %906 = vmatmul.mubr.f32.gmra.mrb[0].mxu0 %v621
    %v907 = vpop.f32.mrb[0].mxu0
    %v908 = vadd.f32 0.0, %v907
    %v909 = vpop.f32.mrb[0].mxu0
    %910 = vmatprep.mubr.f32.mxu0 0.0
    %911 = vmatmul.mubr.f32.gmra.mrb[0].mxu0 %v624
    %v912 = vpop.f32.mrb[0].mxu0
    %v913 = vadd.f32 0.0, %v912
    %v914 = vpop.f32.mrb[0].mxu0
    %915 = vdwg.mxu0
    %916 = vmatprep.subr.mxu0 0.0
    %917 = vmatpush1.msra.mxu0 %v693
    %918 = vmatprep.subr.mxu0 0.0
    %919 = vmatpush1.msra.mxu0 %v698
    %920 = vmatprep.subr.mxu0 0.0
    %921 = vmatpush1.msra.mxu0 %v703
    %922 = vmatprep.subr.mxu0 0.0
    %923 = vmatpush1.msra.mxu0 %v708
    %924 = vmatprep.subr.mxu0 0.0
    %925 = vmatpush1.msra.mxu0 %v713
    %926 = vmatprep.subr.mxu0 0.0
    %927 = vmatpush1.msra.mxu0 %v718
    %928 = vmatprep.subr.mxu0 0.0
    %929 = vmatpush1.msra.mxu0 %v723
    %930 = vmatprep.subr.mxu0 0.0
    %931 = vmatpush1.msra.mxu0 %v728
    %932 = vmatprep.subr.mxu0 0.0
    %933 = vmatpush1.msra.mxu0 %v733
    %934 = vmatprep.subr.mxu0 0.0
    %935 = vmatpush1.msra.mxu0 %v738
    %936 = vmatprep.subr.mxu0 0.0
    %937 = vmatpush1.msra.mxu0 %v743
    %938 = vmatprep.subr.mxu0 0.0
    %939 = vmatpush1.msra.mxu0 %v748
    %940 = vmatprep.subr.mxu0 0.0
    %941 = vmatpush1.msra.mxu0 %v753
    %942 = vmatprep.subr.mxu0 0.0
    %943 = vmatpush1.msra.mxu0 %v758
    %944 = vmatprep.subr.mxu0 0.0
    %945 = vmatpush1.msra.mxu0 %v763
    %946 = vmatprep.subr.mxu0 0.0
    %947 = vmatpush1.msra.mxu0 %v768
    %948 = vmatprep.subr.mxu0 0.0
    %949 = vmatpush1.msra.mxu0 0.0
    %950 = vmatprep.subr.mxu0 0.0
    %951 = vmatpush1.msra.mxu0 0.0
    %952 = vmatprep.subr.mxu0 0.0
    %953 = vmatpush1.msra.mxu0 0.0
    %954 = vmatprep.subr.mxu0 0.0
    %955 = vmatpush1.msra.mxu0 0.0
    %956 = vmatprep.subr.mxu0 0.0
    %957 = vmatpush1.msra.mxu0 0.0
    %958 = vmatprep.subr.mxu0 0.0
    %959 = vmatpush1.msra.mxu0 0.0
    %960 = vmatprep.subr.mxu0 0.0
    %961 = vmatpush1.msra.mxu0 0.0
    %962 = vmatprep.subr.mxu0 0.0
    %963 = vmatpush1.msra.mxu0 0.0
    %964 = vmatprep.subr.mxu0 0.0
    %965 = vmatpush1.msra.mxu0 0.0
    %966 = vmatprep.subr.mxu0 0.0
    %967 = vmatpush1.msra.mxu0 0.0
    %968 = vmatprep.subr.mxu0 0.0
    %969 = vmatpush1.msra.mxu0 0.0
    %970 = vmatprep.subr.mxu0 0.0
    %971 = vmatpush1.msra.mxu0 0.0
    %972 = vmatprep.subr.mxu0 0.0
    %973 = vmatpush1.msra.mxu0 0.0
    %974 = vmatprep.subr.mxu0 0.0
    %975 = vmatpush1.msra.mxu0 0.0
    %976 = vmatprep.subr.mxu0 0.0
    %977 = vmatpush1.msra.mxu0 0.0
    %978 = vmatprep.subr.mxu0 0.0
    %979 = vmatpush1.msra.mxu0 0.0
    %980 = vmatprep.mubr.f32.mxu0 0.0
    %981 = vmatmul.mubr.f32.gmra.mrb[0].mxu0 %v41
    %v982 = vpop.f32.mrb[0].mxu0
    %v983 = vadd.f32 %v838, %v982
    %v984 = vpop.f32.mrb[0].mxu0
    %985 = vmatprep.mubr.f32.mxu0 0.0
    %986 = vmatmul.mubr.f32.gmra.mrb[0].mxu0 %v42
    %v987 = vpop.f32.mrb[0].mxu0
    %v988 = vadd.f32 %v843, %v987
    %v989 = vpop.f32.mrb[0].mxu0
    %990 = vmatprep.mubr.f32.mxu0 0.0
    %991 = vmatmul.mubr.f32.gmra.mrb[0].mxu0 %v43
    %v992 = vpop.f32.mrb[0].mxu0
    %v993 = vadd.f32 %v848, %v992
    %v994 = vpop.f32.mrb[0].mxu0
    %995 = vmatprep.mubr.f32.mxu0 0.0
    %996 = vmatmul.mubr.f32.gmra.mrb[0].mxu0 %v44
    %v997 = vpop.f32.mrb[0].mxu0
    %v998 = vadd.f32 %v853, %v997
    %v999 = vpop.f32.mrb[0].mxu0
    %1000 = vmatprep.mubr.f32.mxu0 0.0
    %1001 = vmatmul.mubr.f32.gmra.mrb[0].mxu0 %v45
    %v1002 = vpop.f32.mrb[0].mxu0
    %v1003 = vadd.f32 %v858, %v1002
    %v1004 = vpop.f32.mrb[0].mxu0
    %1005 = vmatprep.mubr.f32.mxu0 0.0
    %1006 = vmatmul.mubr.f32.gmra.mrb[0].mxu0 %v46
    %v1007 = vpop.f32.mrb[0].mxu0
    %v1008 = vadd.f32 %v863, %v1007
    %v1009 = vpop.f32.mrb[0].mxu0
    %1010 = vmatprep.mubr.f32.mxu0 0.0
    %1011 = vmatmul.mubr.f32.gmra.mrb[0].mxu0 %v47
    %v1012 = vpop.f32.mrb[0].mxu0
    %v1013 = vadd.f32 %v868, %v1012
    %v1014 = vpop.f32.mrb[0].mxu0
    %1015 = vmatprep.mubr.f32.mxu0 0.0
    %1016 = vmatmul.mubr.f32.gmra.mrb[0].mxu0 %v48
    %v1017 = vpop.f32.mrb[0].mxu0
    %v1018 = vadd.f32 %v873, %v1017
    %v1019 = vpop.f32.mrb[0].mxu0
    %1020 = vmatprep.mubr.f32.mxu0 0.0
    %1021 = vmatmul.mubr.f32.gmra.mrb[0].mxu0 %v49
    %v1022 = vpop.f32.mrb[0].mxu0
    %v1023 = vadd.f32 %v878, %v1022
    %v1024 = vpop.f32.mrb[0].mxu0
    %1025 = vmatprep.mubr.f32.mxu0 0.0
    %1026 = vmatmul.mubr.f32.gmra.mrb[0].mxu0 %v50
    %v1027 = vpop.f32.mrb[0].mxu0
    %v1028 = vadd.f32 %v883, %v1027
    %v1029 = vpop.f32.mrb[0].mxu0
    %1030 = vmatprep.mubr.f32.mxu0 0.0
    %1031 = vmatmul.mubr.f32.gmra.mrb[0].mxu0 %v51
    %v1032 = vpop.f32.mrb[0].mxu0
    %v1033 = vadd.f32 %v888, %v1032
    %v1034 = vpop.f32.mrb[0].mxu0
    %1035 = vmatprep.mubr.f32.mxu0 0.0
    %1036 = vmatmul.mubr.f32.gmra.mrb[0].mxu0 %v52
    %v1037 = vpop.f32.mrb[0].mxu0
    %v1038 = vadd.f32 %v893, %v1037
    %v1039 = vpop.f32.mrb[0].mxu0
    %1040 = vmatprep.mubr.f32.mxu0 0.0
    %1041 = vmatmul.mubr.f32.gmra.mrb[0].mxu0 %v53
    %v1042 = vpop.f32.mrb[0].mxu0
    %v1043 = vadd.f32 %v898, %v1042
    %v1044 = vpop.f32.mrb[0].mxu0
    %1045 = vmatprep.mubr.f32.mxu0 0.0
    %1046 = vmatmul.mubr.f32.gmra.mrb[0].mxu0 %v54
    %v1047 = vpop.f32.mrb[0].mxu0
    %v1048 = vadd.f32 %v903, %v1047
    %v1049 = vpop.f32.mrb[0].mxu0
    %1050 = vmatprep.mubr.f32.mxu0 0.0
    %1051 = vmatmul.mubr.f32.gmra.mrb[0].mxu0 %v55
    %v1052 = vpop.f32.mrb[0].mxu0
    %v1053 = vadd.f32 %v908, %v1052
    %v1054 = vpop.f32.mrb[0].mxu0
    %1055 = vmatprep.mubr.f32.mxu0 0.0
    %1056 = vmatmul.mubr.f32.gmra.mrb[0].mxu0 %v56
    %v1057 = vpop.f32.mrb[0].mxu0
    %v1058 = vadd.f32 %v913, %v1057
    %v1059 = vpop.f32.mrb[0].mxu0
    %1060 = vdwg.mxu0
    %v1061 = vlaneseq
    %v1062 = vshrl.u32 %v1061, 7
    %v1063 = vsub.s32 1, %v1062
    %v1064 = vrot.slane %v57, %v1063
    %v1065 = vadd.f32 %v983, %v1064
    %v1066 = vadd.f32 %v988, %v1064
    %v1067 = vadd.f32 %v993, %v1064
    %v1068 = vadd.f32 %v998, %v1064
    %v1069 = vadd.f32 %v1003, %v1064
    %v1070 = vadd.f32 %v1008, %v1064
    %v1071 = vadd.f32 %v1013, %v1064
    %v1072 = vadd.f32 %v1018, %v1064
    %v1073 = vadd.f32 %v1023, %v1064
    %v1074 = vadd.f32 %v1028, %v1064
    %v1075 = vadd.f32 %v1033, %v1064
    %v1076 = vadd.f32 %v1038, %v1064
    %v1077 = vadd.f32 %v1043, %v1064
    %v1078 = vadd.f32 %v1048, %v1064
    %v1079 = vadd.f32 %v1053, %v1064
    %v1080 = vadd.f32 %v1058, %v1064
    %v1081 = vld [vmem:[#allocation2 + $0x80] sm:$0xff]
    %v1082 = vld [vmem:[#allocation2 + $0x88] sm:$0xff]
    %v1083 = vld [vmem:[#allocation2 + $0x90] sm:$0xff]
    %v1084 = vld [vmem:[#allocation2 + $0x98] sm:$0xff]
    %v1085 = vld [vmem:[#allocation2 + $0xa0] sm:$0xff]
    %v1086 = vld [vmem:[#allocation2 + $0xa8] sm:$0xff]
    %v1087 = vld [vmem:[#allocation2 + $0xb0] sm:$0xff]
    %v1088 = vld [vmem:[#allocation2 + $0xb8] sm:$0xff]
    %v1090 = vsel %vm66, %v1065, 0
    %v1093 = vsel %vm66, %v1066, 0
    %v1096 = vsel %vm66, %v1067, 0
    %v1099 = vsel %vm66, %v1068, 0
    %v1102 = vsel %vm66, %v1069, 0
    %v1105 = vsel %vm66, %v1070, 0
    %v1108 = vsel %vm66, %v1071, 0
    %v1111 = vsel %vm66, %v1072, 0
    %v1114 = vsel %vm66, %v1073, 0
    %v1117 = vsel %vm66, %v1074, 0
    %v1120 = vsel %vm66, %v1075, 0
    %v1123 = vsel %vm66, %v1076, 0
    %v1126 = vsel %vm66, %v1077, 0
    %v1129 = vsel %vm66, %v1078, 0
    %v1132 = vsel %vm66, %v1079, 0
    %v1135 = vsel %vm66, %v1080, 0
    %1137 = vmatprep.subr.mxu0 0.0
    %1138 = vmatpush1.msra.mxu0 %v1081
    %1139 = vmatprep.subr.mxu0 0.0
    %1140 = vmatpush1.msra.mxu0 %v1082
    %1141 = vmatprep.subr.mxu0 0.0
    %1142 = vmatpush1.msra.mxu0 %v1083
    %1143 = vmatprep.subr.mxu0 0.0
    %1144 = vmatpush1.msra.mxu0 %v1084
    %1145 = vmatprep.subr.mxu0 0.0
    %1146 = vmatpush1.msra.mxu0 0.0
    %1147 = vmatprep.subr.mxu0 0.0
    %1148 = vmatpush1.msra.mxu0 0.0
    %1149 = vmatprep.subr.mxu0 0.0
    %1150 = vmatpush1.msra.mxu0 0.0
    %1151 = vmatprep.subr.mxu0 0.0
    %1152 = vmatpush1.msra.mxu0 0.0
    %1153 = vmatprep.subr.mxu0 0.0
    %1154 = vmatpush1.msra.mxu0 0.0
    %1155 = vmatprep.subr.mxu0 0.0
    %1156 = vmatpush1.msra.mxu0 0.0
    %1157 = vmatprep.subr.mxu0 0.0
    %1158 = vmatpush1.msra.mxu0 0.0
    %1159 = vmatprep.subr.mxu0 0.0
    %1160 = vmatpush1.msra.mxu0 0.0
    %1161 = vmatprep.subr.mxu0 0.0
    %1162 = vmatpush1.msra.mxu0 0.0
    %1163 = vmatprep.subr.mxu0 0.0
    %1164 = vmatpush1.msra.mxu0 0.0
    %1165 = vmatprep.subr.mxu0 0.0
    %1166 = vmatpush1.msra.mxu0 0.0
    %1167 = vmatprep.subr.mxu0 0.0
    %1168 = vmatpush1.msra.mxu0 0.0
    %1169 = vmatprep.subr.mxu0 0.0
    %1170 = vmatpush1.msra.mxu0 0.0
    %1171 = vmatprep.subr.mxu0 0.0
    %1172 = vmatpush1.msra.mxu0 0.0
    %1173 = vmatprep.subr.mxu0 0.0
    %1174 = vmatpush1.msra.mxu0 0.0
    %1175 = vmatprep.subr.mxu0 0.0
    %1176 = vmatpush1.msra.mxu0 0.0
    %1177 = vmatprep.subr.mxu0 0.0
    %1178 = vmatpush1.msra.mxu0 0.0
    %1179 = vmatprep.subr.mxu0 0.0
    %1180 = vmatpush1.msra.mxu0 0.0
    %1181 = vmatprep.subr.mxu0 0.0
    %1182 = vmatpush1.msra.mxu0 0.0
    %1183 = vmatprep.subr.mxu0 0.0
    %1184 = vmatpush1.msra.mxu0 0.0
    %1185 = vmatprep.subr.mxu0 0.0
    %1186 = vmatpush1.msra.mxu0 0.0
    %1187 = vmatprep.subr.mxu0 0.0
    %1188 = vmatpush1.msra.mxu0 0.0
    %1189 = vmatprep.subr.mxu0 0.0
    %1190 = vmatpush1.msra.mxu0 0.0
    %1191 = vmatprep.subr.mxu0 0.0
    %1192 = vmatpush1.msra.mxu0 0.0
    %1193 = vmatprep.subr.mxu0 0.0
    %1194 = vmatpush1.msra.mxu0 0.0
    %1195 = vmatprep.subr.mxu0 0.0
    %1196 = vmatpush1.msra.mxu0 0.0
    %1197 = vmatprep.subr.mxu0 0.0
    %1198 = vmatpush1.msra.mxu0 0.0
    %1199 = vmatprep.subr.mxu0 0.0
    %1200 = vmatpush1.msra.mxu0 0.0
    %1201 = vmatprep.mubr.f32.mxu0 0.0
    %1202 = vmatmul.mubr.f32.gmra.mrb[0].mxu0 %v1090
    %v1203 = vpop.f32.mrb[0].mxu0
    %v1204 = vadd.f32 0.0, %v1203
    %v1205 = vpop.f32.mrb[0].mxu0
    %1206 = vmatprep.mubr.f32.mxu0 0.0
    %1207 = vmatmul.mubr.f32.gmra.mrb[0].mxu0 %v1093
    %v1208 = vpop.f32.mrb[0].mxu0
    %v1209 = vadd.f32 0.0, %v1208
    %v1210 = vpop.f32.mrb[0].mxu0
    %1211 = vmatprep.mubr.f32.mxu0 0.0
    %1212 = vmatmul.mubr.f32.gmra.mrb[0].mxu0 %v1096
    %v1213 = vpop.f32.mrb[0].mxu0
    %v1214 = vadd.f32 0.0, %v1213
    %v1215 = vpop.f32.mrb[0].mxu0
    %1216 = vmatprep.mubr.f32.mxu0 0.0
    %1217 = vmatmul.mubr.f32.gmra.mrb[0].mxu0 %v1099
    %v1218 = vpop.f32.mrb[0].mxu0
    %v1219 = vadd.f32 0.0, %v1218
    %v1220 = vpop.f32.mrb[0].mxu0
    %1221 = vmatprep.mubr.f32.mxu0 0.0
    %1222 = vmatmul.mubr.f32.gmra.mrb[0].mxu0 %v1102
    %v1223 = vpop.f32.mrb[0].mxu0
    %v1224 = vadd.f32 0.0, %v1223
    %v1225 = vpop.f32.mrb[0].mxu0
    %1226 = vmatprep.mubr.f32.mxu0 0.0
    %1227 = vmatmul.mubr.f32.gmra.mrb[0].mxu0 %v1105
    %v1228 = vpop.f32.mrb[0].mxu0
    %v1229 = vadd.f32 0.0, %v1228
    %v1230 = vpop.f32.mrb[0].mxu0
    %1231 = vmatprep.mubr.f32.mxu0 0.0
    %1232 = vmatmul.mubr.f32.gmra.mrb[0].mxu0 %v1108
    %v1233 = vpop.f32.mrb[0].mxu0
    %v1234 = vadd.f32 0.0, %v1233
    %v1235 = vpop.f32.mrb[0].mxu0
    %1236 = vmatprep.mubr.f32.mxu0 0.0
    %1237 = vmatmul.mubr.f32.gmra.mrb[0].mxu0 %v1111
    %v1238 = vpop.f32.mrb[0].mxu0
    %v1239 = vadd.f32 0.0, %v1238
    %v1240 = vpop.f32.mrb[0].mxu0
    %1241 = vmatprep.mubr.f32.mxu0 0.0
    %1242 = vmatmul.mubr.f32.gmra.mrb[0].mxu0 %v1114
    %v1243 = vpop.f32.mrb[0].mxu0
    %v1244 = vadd.f32 0.0, %v1243
    %v1245 = vpop.f32.mrb[0].mxu0
    %1246 = vmatprep.mubr.f32.mxu0 0.0
    %1247 = vmatmul.mubr.f32.gmra.mrb[0].mxu0 %v1117
    %v1248 = vpop.f32.mrb[0].mxu0
    %v1249 = vadd.f32 0.0, %v1248
    %v1250 = vpop.f32.mrb[0].mxu0
    %1251 = vmatprep.mubr.f32.mxu0 0.0
    %1252 = vmatmul.mubr.f32.gmra.mrb[0].mxu0 %v1120
    %v1253 = vpop.f32.mrb[0].mxu0
    %v1254 = vadd.f32 0.0, %v1253
    %v1255 = vpop.f32.mrb[0].mxu0
    %1256 = vmatprep.mubr.f32.mxu0 0.0
    %1257 = vmatmul.mubr.f32.gmra.mrb[0].mxu0 %v1123
    %v1258 = vpop.f32.mrb[0].mxu0
    %v1259 = vadd.f32 0.0, %v1258
    %v1260 = vpop.f32.mrb[0].mxu0
    %1261 = vmatprep.mubr.f32.mxu0 0.0
    %1262 = vmatmul.mubr.f32.gmra.mrb[0].mxu0 %v1126
    %v1263 = vpop.f32.mrb[0].mxu0
    %v1264 = vadd.f32 0.0, %v1263
    %v1265 = vpop.f32.mrb[0].mxu0
    %1266 = vmatprep.mubr.f32.mxu0 0.0
    %1267 = vmatmul.mubr.f32.gmra.mrb[0].mxu0 %v1129
    %v1268 = vpop.f32.mrb[0].mxu0
    %v1269 = vadd.f32 0.0, %v1268
    %v1270 = vpop.f32.mrb[0].mxu0
    %1271 = vmatprep.mubr.f32.mxu0 0.0
    %1272 = vmatmul.mubr.f32.gmra.mrb[0].mxu0 %v1132
    %v1273 = vpop.f32.mrb[0].mxu0
    %v1274 = vadd.f32 0.0, %v1273
    %v1275 = vpop.f32.mrb[0].mxu0
    %1276 = vmatprep.mubr.f32.mxu0 0.0
    %1277 = vmatmul.mubr.f32.gmra.mrb[0].mxu0 %v1135
    %v1278 = vpop.f32.mrb[0].mxu0
    %v1279 = vadd.f32 0.0, %v1278
    %v1280 = vpop.f32.mrb[0].mxu0
    %1281 = vdwg.mxu0
    %1282 = vmatprep.subr.mxu0 0.0
    %1283 = vmatpush1.msra.mxu0 %v1085
    %1284 = vmatprep.subr.mxu0 0.0
    %1285 = vmatpush1.msra.mxu0 %v1086
    %1286 = vmatprep.subr.mxu0 0.0
    %1287 = vmatpush1.msra.mxu0 %v1087
    %1288 = vmatprep.subr.mxu0 0.0
    %1289 = vmatpush1.msra.mxu0 %v1088
    %1290 = vmatprep.subr.mxu0 0.0
    %1291 = vmatpush1.msra.mxu0 0.0
    %1292 = vmatprep.subr.mxu0 0.0
    %1293 = vmatpush1.msra.mxu0 0.0
    %1294 = vmatprep.subr.mxu0 0.0
    %1295 = vmatpush1.msra.mxu0 0.0
    %1296 = vmatprep.subr.mxu0 0.0
    %1297 = vmatpush1.msra.mxu0 0.0
    %1298 = vmatprep.subr.mxu0 0.0
    %1299 = vmatpush1.msra.mxu0 0.0
    %1300 = vmatprep.subr.mxu0 0.0
    %1301 = vmatpush1.msra.mxu0 0.0
    %1302 = vmatprep.subr.mxu0 0.0
    %1303 = vmatpush1.msra.mxu0 0.0
    %1304 = vmatprep.subr.mxu0 0.0
    %1305 = vmatpush1.msra.mxu0 0.0
    %1306 = vmatprep.subr.mxu0 0.0
    %1307 = vmatpush1.msra.mxu0 0.0
    %1308 = vmatprep.subr.mxu0 0.0
    %1309 = vmatpush1.msra.mxu0 0.0
    %1310 = vmatprep.subr.mxu0 0.0
    %1311 = vmatpush1.msra.mxu0 0.0
    %1312 = vmatprep.subr.mxu0 0.0
    %1313 = vmatpush1.msra.mxu0 0.0
    %1314 = vmatprep.subr.mxu0 0.0
    %1315 = vmatpush1.msra.mxu0 0.0
    %1316 = vmatprep.subr.mxu0 0.0
    %1317 = vmatpush1.msra.mxu0 0.0
    %1318 = vmatprep.subr.mxu0 0.0
    %1319 = vmatpush1.msra.mxu0 0.0
    %1320 = vmatprep.subr.mxu0 0.0
    %1321 = vmatpush1.msra.mxu0 0.0
    %1322 = vmatprep.subr.mxu0 0.0
    %1323 = vmatpush1.msra.mxu0 0.0
    %1324 = vmatprep.subr.mxu0 0.0
    %1325 = vmatpush1.msra.mxu0 0.0
    %1326 = vmatprep.subr.mxu0 0.0
    %1327 = vmatpush1.msra.mxu0 0.0
    %1328 = vmatprep.subr.mxu0 0.0
    %1329 = vmatpush1.msra.mxu0 0.0
    %1330 = vmatprep.subr.mxu0 0.0
    %1331 = vmatpush1.msra.mxu0 0.0
    %1332 = vmatprep.subr.mxu0 0.0
    %1333 = vmatpush1.msra.mxu0 0.0
    %1334 = vmatprep.subr.mxu0 0.0
    %1335 = vmatpush1.msra.mxu0 0.0
    %1336 = vmatprep.subr.mxu0 0.0
    %1337 = vmatpush1.msra.mxu0 0.0
    %1338 = vmatprep.subr.mxu0 0.0
    %1339 = vmatpush1.msra.mxu0 0.0
    %1340 = vmatprep.subr.mxu0 0.0
    %1341 = vmatpush1.msra.mxu0 0.0
    %1342 = vmatprep.subr.mxu0 0.0
    %1343 = vmatpush1.msra.mxu0 0.0
    %1344 = vmatprep.subr.mxu0 0.0
    %1345 = vmatpush1.msra.mxu0 0.0
    %1346 = vmatprep.mubr.f32.mxu0 0.0
    %1347 = vmatmul.mubr.f32.gmra.mrb[0].mxu0 %v1090
    %v1348 = vpop.f32.mrb[0].mxu0
    %v1349 = vadd.f32 0.0, %v1348
    %v1350 = vpop.f32.mrb[0].mxu0
    %1351 = vmatprep.mubr.f32.mxu0 0.0
    %1352 = vmatmul.mubr.f32.gmra.mrb[0].mxu0 %v1093
    %v1353 = vpop.f32.mrb[0].mxu0
    %v1354 = vadd.f32 0.0, %v1353
    %v1355 = vpop.f32.mrb[0].mxu0
    %1356 = vmatprep.mubr.f32.mxu0 0.0
    %1357 = vmatmul.mubr.f32.gmra.mrb[0].mxu0 %v1096
    %v1358 = vpop.f32.mrb[0].mxu0
    %v1359 = vadd.f32 0.0, %v1358
    %v1360 = vpop.f32.mrb[0].mxu0
    %1361 = vmatprep.mubr.f32.mxu0 0.0
    %1362 = vmatmul.mubr.f32.gmra.mrb[0].mxu0 %v1099
    %v1363 = vpop.f32.mrb[0].mxu0
    %v1364 = vadd.f32 0.0, %v1363
    %v1365 = vpop.f32.mrb[0].mxu0
    %1366 = vmatprep.mubr.f32.mxu0 0.0
    %1367 = vmatmul.mubr.f32.gmra.mrb[0].mxu0 %v1102
    %v1368 = vpop.f32.mrb[0].mxu0
    %v1369 = vadd.f32 0.0, %v1368
    %v1370 = vpop.f32.mrb[0].mxu0
    %1371 = vmatprep.mubr.f32.mxu0 0.0
    %1372 = vmatmul.mubr.f32.gmra.mrb[0].mxu0 %v1105
    %v1373 = vpop.f32.mrb[0].mxu0
    %v1374 = vadd.f32 0.0, %v1373
    %v1375 = vpop.f32.mrb[0].mxu0
    %1376 = vmatprep.mubr.f32.mxu0 0.0
    %1377 = vmatmul.mubr.f32.gmra.mrb[0].mxu0 %v1108
    %v1378 = vpop.f32.mrb[0].mxu0
    %v1379 = vadd.f32 0.0, %v1378
    %v1380 = vpop.f32.mrb[0].mxu0
    %1381 = vmatprep.mubr.f32.mxu0 0.0
    %1382 = vmatmul.mubr.f32.gmra.mrb[0].mxu0 %v1111
    %v1383 = vpop.f32.mrb[0].mxu0
    %v1384 = vadd.f32 0.0, %v1383
    %v1385 = vpop.f32.mrb[0].mxu0
    %1386 = vmatprep.mubr.f32.mxu0 0.0
    %1387 = vmatmul.mubr.f32.gmra.mrb[0].mxu0 %v1114
    %v1388 = vpop.f32.mrb[0].mxu0
    %v1389 = vadd.f32 0.0, %v1388
    %v1390 = vpop.f32.mrb[0].mxu0
    %1391 = vmatprep.mubr.f32.mxu0 0.0
    %1392 = vmatmul.mubr.f32.gmra.mrb[0].mxu0 %v1117
    %v1393 = vpop.f32.mrb[0].mxu0
    %v1394 = vadd.f32 0.0, %v1393
    %v1395 = vpop.f32.mrb[0].mxu0
    %1396 = vmatprep.mubr.f32.mxu0 0.0
    %1397 = vmatmul.mubr.f32.gmra.mrb[0].mxu0 %v1120
    %v1398 = vpop.f32.mrb[0].mxu0
    %v1399 = vadd.f32 0.0, %v1398
    %v1400 = vpop.f32.mrb[0].mxu0
    %1401 = vmatprep.mubr.f32.mxu0 0.0
    %1402 = vmatmul.mubr.f32.gmra.mrb[0].mxu0 %v1123
    %v1403 = vpop.f32.mrb[0].mxu0
    %v1404 = vadd.f32 0.0, %v1403
    %v1405 = vpop.f32.mrb[0].mxu0
    %1406 = vmatprep.mubr.f32.mxu0 0.0
    %1407 = vmatmul.mubr.f32.gmra.mrb[0].mxu0 %v1126
    %v1408 = vpop.f32.mrb[0].mxu0
    %v1409 = vadd.f32 0.0, %v1408
    %v1410 = vpop.f32.mrb[0].mxu0
    %1411 = vmatprep.mubr.f32.mxu0 0.0
    %1412 = vmatmul.mubr.f32.gmra.mrb[0].mxu0 %v1129
    %v1413 = vpop.f32.mrb[0].mxu0
    %v1414 = vadd.f32 0.0, %v1413
    %v1415 = vpop.f32.mrb[0].mxu0
    %1416 = vmatprep.mubr.f32.mxu0 0.0
    %1417 = vmatmul.mubr.f32.gmra.mrb[0].mxu0 %v1132
    %v1418 = vpop.f32.mrb[0].mxu0
    %v1419 = vadd.f32 0.0, %v1418
    %v1420 = vpop.f32.mrb[0].mxu0
    %1421 = vmatprep.mubr.f32.mxu0 0.0
    %1422 = vmatmul.mubr.f32.gmra.mrb[0].mxu0 %v1135
    %v1423 = vpop.f32.mrb[0].mxu0
    %v1424 = vadd.f32 0.0, %v1423
    %v1425 = vpop.f32.mrb[0].mxu0
    %1426 = vdwg.mxu0
    %1427 = vmatprep.subr.mxu0 0.0
    %1428 = vmatpush1.msra.mxu0 %v1204
    %1429 = vmatprep.subr.mxu0 0.0
    %1430 = vmatpush1.msra.mxu0 %v1209
    %1431 = vmatprep.subr.mxu0 0.0
    %1432 = vmatpush1.msra.mxu0 %v1214
    %1433 = vmatprep.subr.mxu0 0.0
    %1434 = vmatpush1.msra.mxu0 %v1219
    %1435 = vmatprep.subr.mxu0 0.0
    %1436 = vmatpush1.msra.mxu0 %v1224
    %1437 = vmatprep.subr.mxu0 0.0
    %1438 = vmatpush1.msra.mxu0 %v1229
    %1439 = vmatprep.subr.mxu0 0.0
    %1440 = vmatpush1.msra.mxu0 %v1234
    %1441 = vmatprep.subr.mxu0 0.0
    %1442 = vmatpush1.msra.mxu0 %v1239
    %1443 = vmatprep.subr.mxu0 0.0
    %1444 = vmatpush1.msra.mxu0 %v1244
    %1445 = vmatprep.subr.mxu0 0.0
    %1446 = vmatpush1.msra.mxu0 %v1249
    %1447 = vmatprep.subr.mxu0 0.0
    %1448 = vmatpush1.msra.mxu0 %v1254
    %1449 = vmatprep.subr.mxu0 0.0
    %1450 = vmatpush1.msra.mxu0 %v1259
    %1451 = vmatprep.subr.mxu0 0.0
    %1452 = vmatpush1.msra.mxu0 %v1264
    %1453 = vmatprep.subr.mxu0 0.0
    %1454 = vmatpush1.msra.mxu0 %v1269
    %1455 = vmatprep.subr.mxu0 0.0
    %1456 = vmatpush1.msra.mxu0 %v1274
    %1457 = vmatprep.subr.mxu0 0.0
    %1458 = vmatpush1.msra.mxu0 %v1279
    %1459 = vmatprep.subr.mxu0 0.0
    %1460 = vmatpush1.msra.mxu0 0.0
    %1461 = vmatprep.subr.mxu0 0.0
    %1462 = vmatpush1.msra.mxu0 0.0
    %1463 = vmatprep.subr.mxu0 0.0
    %1464 = vmatpush1.msra.mxu0 0.0
    %1465 = vmatprep.subr.mxu0 0.0
    %1466 = vmatpush1.msra.mxu0 0.0
    %1467 = vmatprep.subr.mxu0 0.0
    %1468 = vmatpush1.msra.mxu0 0.0
    %1469 = vmatprep.subr.mxu0 0.0
    %1470 = vmatpush1.msra.mxu0 0.0
    %1471 = vmatprep.subr.mxu0 0.0
    %1472 = vmatpush1.msra.mxu0 0.0
    %1473 = vmatprep.subr.mxu0 0.0
    %1474 = vmatpush1.msra.mxu0 0.0
    %1475 = vmatprep.subr.mxu0 0.0
    %1476 = vmatpush1.msra.mxu0 0.0
    %1477 = vmatprep.subr.mxu0 0.0
    %1478 = vmatpush1.msra.mxu0 0.0
    %1479 = vmatprep.subr.mxu0 0.0
    %1480 = vmatpush1.msra.mxu0 0.0
    %1481 = vmatprep.subr.mxu0 0.0
    %1482 = vmatpush1.msra.mxu0 0.0
    %1483 = vmatprep.subr.mxu0 0.0
    %1484 = vmatpush1.msra.mxu0 0.0
    %1485 = vmatprep.subr.mxu0 0.0
    %1486 = vmatpush1.msra.mxu0 0.0
    %1487 = vmatprep.subr.mxu0 0.0
    %1488 = vmatpush1.msra.mxu0 0.0
    %1489 = vmatprep.subr.mxu0 0.0
    %1490 = vmatpush1.msra.mxu0 0.0
    %1491 = vmatprep.mubr.f32.mxu0 0.0
    %1492 = vmatmul.mubr.f32.gmra.mrb[0].mxu0 %v41
    %v1493 = vpop.f32.mrb[0].mxu0
    %v1494 = vadd.f32 %v1349, %v1493
    %v1495 = vpop.f32.mrb[0].mxu0
    %1496 = vmatprep.mubr.f32.mxu0 0.0
    %1497 = vmatmul.mubr.f32.gmra.mrb[0].mxu0 %v42
    %v1498 = vpop.f32.mrb[0].mxu0
    %v1499 = vadd.f32 %v1354, %v1498
    %v1500 = vpop.f32.mrb[0].mxu0
    %1501 = vmatprep.mubr.f32.mxu0 0.0
    %1502 = vmatmul.mubr.f32.gmra.mrb[0].mxu0 %v43
    %v1503 = vpop.f32.mrb[0].mxu0
    %v1504 = vadd.f32 %v1359, %v1503
    %v1505 = vpop.f32.mrb[0].mxu0
    %1506 = vmatprep.mubr.f32.mxu0 0.0
    %1507 = vmatmul.mubr.f32.gmra.mrb[0].mxu0 %v44
    %v1508 = vpop.f32.mrb[0].mxu0
    %v1509 = vadd.f32 %v1364, %v1508
    %v1510 = vpop.f32.mrb[0].mxu0
    %1511 = vmatprep.mubr.f32.mxu0 0.0
    %1512 = vmatmul.mubr.f32.gmra.mrb[0].mxu0 %v45
    %v1513 = vpop.f32.mrb[0].mxu0
    %v1514 = vadd.f32 %v1369, %v1513
    %v1515 = vpop.f32.mrb[0].mxu0
    %1516 = vmatprep.mubr.f32.mxu0 0.0
    %1517 = vmatmul.mubr.f32.gmra.mrb[0].mxu0 %v46
    %v1518 = vpop.f32.mrb[0].mxu0
    %v1519 = vadd.f32 %v1374, %v1518
    %v1520 = vpop.f32.mrb[0].mxu0
    %1521 = vmatprep.mubr.f32.mxu0 0.0
    %1522 = vmatmul.mubr.f32.gmra.mrb[0].mxu0 %v47
    %v1523 = vpop.f32.mrb[0].mxu0
    %v1524 = vadd.f32 %v1379, %v1523
    %v1525 = vpop.f32.mrb[0].mxu0
    %1526 = vmatprep.mubr.f32.mxu0 0.0
    %1527 = vmatmul.mubr.f32.gmra.mrb[0].mxu0 %v48
    %v1528 = vpop.f32.mrb[0].mxu0
    %v1529 = vadd.f32 %v1384, %v1528
    %v1530 = vpop.f32.mrb[0].mxu0
    %1531 = vmatprep.mubr.f32.mxu0 0.0
    %1532 = vmatmul.mubr.f32.gmra.mrb[0].mxu0 %v49
    %v1533 = vpop.f32.mrb[0].mxu0
    %v1534 = vadd.f32 %v1389, %v1533
    %v1535 = vpop.f32.mrb[0].mxu0
    %1536 = vmatprep.mubr.f32.mxu0 0.0
    %1537 = vmatmul.mubr.f32.gmra.mrb[0].mxu0 %v50
    %v1538 = vpop.f32.mrb[0].mxu0
    %v1539 = vadd.f32 %v1394, %v1538
    %v1540 = vpop.f32.mrb[0].mxu0
    %1541 = vmatprep.mubr.f32.mxu0 0.0
    %1542 = vmatmul.mubr.f32.gmra.mrb[0].mxu0 %v51
    %v1543 = vpop.f32.mrb[0].mxu0
    %v1544 = vadd.f32 %v1399, %v1543
    %v1545 = vpop.f32.mrb[0].mxu0
    %1546 = vmatprep.mubr.f32.mxu0 0.0
    %1547 = vmatmul.mubr.f32.gmra.mrb[0].mxu0 %v52
    %v1548 = vpop.f32.mrb[0].mxu0
    %v1549 = vadd.f32 %v1404, %v1548
    %v1550 = vpop.f32.mrb[0].mxu0
    %1551 = vmatprep.mubr.f32.mxu0 0.0
    %1552 = vmatmul.mubr.f32.gmra.mrb[0].mxu0 %v53
    %v1553 = vpop.f32.mrb[0].mxu0
    %v1554 = vadd.f32 %v1409, %v1553
    %v1555 = vpop.f32.mrb[0].mxu0
    %1556 = vmatprep.mubr.f32.mxu0 0.0
    %1557 = vmatmul.mubr.f32.gmra.mrb[0].mxu0 %v54
    %v1558 = vpop.f32.mrb[0].mxu0
    %v1559 = vadd.f32 %v1414, %v1558
    %v1560 = vpop.f32.mrb[0].mxu0
    %1561 = vmatprep.mubr.f32.mxu0 0.0
    %1562 = vmatmul.mubr.f32.gmra.mrb[0].mxu0 %v55
    %v1563 = vpop.f32.mrb[0].mxu0
    %v1564 = vadd.f32 %v1419, %v1563
    %v1565 = vpop.f32.mrb[0].mxu0
    %1566 = vmatprep.mubr.f32.mxu0 0.0
    %1567 = vmatmul.mubr.f32.gmra.mrb[0].mxu0 %v56
    %v1568 = vpop.f32.mrb[0].mxu0
    %v1569 = vadd.f32 %v1424, %v1568
    %v1570 = vpop.f32.mrb[0].mxu0
    %1571 = vdwg.mxu0
    %v1572 = vlaneseq
    %v1573 = vshrl.u32 %v1572, 7
    %v1574 = vsub.s32 2, %v1573
    %v1575 = vrot.slane %v57, %v1574
    %v1576 = vadd.f32 %v1494, %v1575
    %v1577 = vadd.f32 %v1499, %v1575
    %v1578 = vadd.f32 %v1504, %v1575
    %v1579 = vadd.f32 %v1509, %v1575
    %v1580 = vadd.f32 %v1514, %v1575
    %v1581 = vadd.f32 %v1519, %v1575
    %v1582 = vadd.f32 %v1524, %v1575
    %v1583 = vadd.f32 %v1529, %v1575
    %v1584 = vadd.f32 %v1534, %v1575
    %v1585 = vadd.f32 %v1539, %v1575
    %v1586 = vadd.f32 %v1544, %v1575
    %v1587 = vadd.f32 %v1549, %v1575
    %v1588 = vadd.f32 %v1554, %v1575
    %v1589 = vadd.f32 %v1559, %v1575
    %v1590 = vadd.f32 %v1564, %v1575
    %v1591 = vadd.f32 %v1569, %v1575
    %v1592 = vld [vmem:[#allocation2 + $0xf0] sm:$0xff]
    %v1593 = vld [vmem:[#allocation2 + $0xc8] sm:$0xff]
    %v1594 = vld [vmem:[#allocation2 + $0xd0] sm:$0xff]
    %v1595 = vld [vmem:[#allocation2 + $0xd8] sm:$0xff]
    %v1596 = vld [vmem:[#allocation2 + $0xe0] sm:$0xff]
    %v1597 = vld [vmem:[#allocation2 + $0xe8] sm:$0x1]
    %1598 = vmatprep.subr.mxu0 0.0
    %1599 = vmatpush1.msra.mxu0 %v1576
    %1600 = vmatprep.subr.mxu0 0.0
    %1601 = vmatpush1.msra.mxu0 %v1577
    %1602 = vmatprep.subr.mxu0 0.0
    %1603 = vmatpush1.msra.mxu0 %v1578
    %1604 = vmatprep.subr.mxu0 0.0
    %1605 = vmatpush1.msra.mxu0 %v1579
    %1606 = vmatprep.subr.mxu0 0.0
    %1607 = vmatpush1.msra.mxu0 %v1580
    %1608 = vmatprep.subr.mxu0 0.0
    %1609 = vmatpush1.msra.mxu0 %v1581
    %1610 = vmatprep.subr.mxu0 0.0
    %1611 = vmatpush1.msra.mxu0 %v1582
    %1612 = vmatprep.subr.mxu0 0.0
    %1613 = vmatpush1.msra.mxu0 %v1583
    %1614 = vmatprep.subr.mxu0 0.0
    %1615 = vmatpush1.msra.mxu0 %v1584
    %1616 = vmatprep.subr.mxu0 0.0
    %1617 = vmatpush1.msra.mxu0 %v1585
    %1618 = vmatprep.subr.mxu0 0.0
    %1619 = vmatpush1.msra.mxu0 %v1586
    %1620 = vmatprep.subr.mxu0 0.0
    %1621 = vmatpush1.msra.mxu0 %v1587
    %1622 = vmatprep.subr.mxu0 0.0
    %1623 = vmatpush1.msra.mxu0 %v1588
    %1624 = vmatprep.subr.mxu0 0.0
    %1625 = vmatpush1.msra.mxu0 %v1589
    %1626 = vmatprep.subr.mxu0 0.0
    %1627 = vmatpush1.msra.mxu0 %v1590
    %1628 = vmatprep.subr.mxu0 0.0
    %1629 = vmatpush1.msra.mxu0 %v1591
    %1630 = vmatprep.subr.mxu0 0.0
    %1631 = vmatpush1.msra.mxu0 0.0
    %1632 = vmatprep.subr.mxu0 0.0
    %1633 = vmatpush1.msra.mxu0 0.0
    %1634 = vmatprep.subr.mxu0 0.0
    %1635 = vmatpush1.msra.mxu0 0.0
    %1636 = vmatprep.subr.mxu0 0.0
    %1637 = vmatpush1.msra.mxu0 0.0
    %1638 = vmatprep.subr.mxu0 0.0
    %1639 = vmatpush1.msra.mxu0 0.0
    %1640 = vmatprep.subr.mxu0 0.0
    %1641 = vmatpush1.msra.mxu0 0.0
    %1642 = vmatprep.subr.mxu0 0.0
    %1643 = vmatpush1.msra.mxu0 0.0
    %1644 = vmatprep.subr.mxu0 0.0
    %1645 = vmatpush1.msra.mxu0 0.0
    %1646 = vmatprep.subr.mxu0 0.0
    %1647 = vmatpush1.msra.mxu0 0.0
    %1648 = vmatprep.subr.mxu0 0.0
    %1649 = vmatpush1.msra.mxu0 0.0
    %1650 = vmatprep.subr.mxu0 0.0
    %1651 = vmatpush1.msra.mxu0 0.0
    %1652 = vmatprep.subr.mxu0 0.0
    %1653 = vmatpush1.msra.mxu0 0.0
    %1654 = vmatprep.subr.mxu0 0.0
    %1655 = vmatpush1.msra.mxu0 0.0
    %1656 = vmatprep.subr.mxu0 0.0
    %1657 = vmatpush1.msra.mxu0 0.0
    %1658 = vmatprep.subr.mxu0 0.0
    %1659 = vmatpush1.msra.mxu0 0.0
    %1660 = vmatprep.subr.mxu0 0.0
    %1661 = vmatpush1.msra.mxu0 0.0
    %1662 = vmatprep.mubr.f32.mxu0 0.0
    %1663 = vmatmul.mubr.f32.gmra.mrb[0].mxu0 %v1592
    %v1664 = vpop.f32.mrb[0].mxu0
    %v1665 = vadd.f32 0.0, %v1664
    %v1666 = vpop.f32.mrb[0].mxu0
    %1667 = vdwg.mxu0
    %v1668 = vlaneseq
    %v1669 = vshrl.u32 %v1668, 7
    %v1670 = vsub.s32 0, %v1669
    %v1671 = vrot.slane %v1597, %v1670
    %v1673 = vsel %vm66, %v1665, 0
    %1675 = vmatprep.subr.mxu0 0.0
    %1676 = vmatpush1.msra.mxu0 %v1593
    %1677 = vmatprep.subr.mxu0 0.0
    %1678 = vmatpush1.msra.mxu0 %v1594
    %1679 = vmatprep.subr.mxu0 0.0
    %1680 = vmatpush1.msra.mxu0 %v1595
    %1681 = vmatprep.subr.mxu0 0.0
    %1682 = vmatpush1.msra.mxu0 %v1596
    %1683 = vmatprep.subr.mxu0 0.0
    %1684 = vmatpush1.msra.mxu0 0.0
    %1685 = vmatprep.subr.mxu0 0.0
    %1686 = vmatpush1.msra.mxu0 0.0
    %1687 = vmatprep.subr.mxu0 0.0
    %1688 = vmatpush1.msra.mxu0 0.0
    %1689 = vmatprep.subr.mxu0 0.0
    %1690 = vmatpush1.msra.mxu0 0.0
    %1691 = vmatprep.subr.mxu0 0.0
    %1692 = vmatpush1.msra.mxu0 0.0
    %1693 = vmatprep.subr.mxu0 0.0
    %1694 = vmatpush1.msra.mxu0 0.0
    %1695 = vmatprep.subr.mxu0 0.0
    %1696 = vmatpush1.msra.mxu0 0.0
    %1697 = vmatprep.subr.mxu0 0.0
    %1698 = vmatpush1.msra.mxu0 0.0
    %1699 = vmatprep.subr.mxu0 0.0
    %1700 = vmatpush1.msra.mxu0 0.0
    %1701 = vmatprep.subr.mxu0 0.0
    %1702 = vmatpush1.msra.mxu0 0.0
    %1703 = vmatprep.subr.mxu0 0.0
    %1704 = vmatpush1.msra.mxu0 0.0
    %1705 = vmatprep.subr.mxu0 0.0
    %1706 = vmatpush1.msra.mxu0 0.0
    %1707 = vmatprep.subr.mxu0 0.0
    %1708 = vmatpush1.msra.mxu0 0.0
    %1709 = vmatprep.subr.mxu0 0.0
    %1710 = vmatpush1.msra.mxu0 0.0
    %1711 = vmatprep.subr.mxu0 0.0
    %1712 = vmatpush1.msra.mxu0 0.0
    %1713 = vmatprep.subr.mxu0 0.0
    %1714 = vmatpush1.msra.mxu0 0.0
    %1715 = vmatprep.subr.mxu0 0.0
    %1716 = vmatpush1.msra.mxu0 0.0
    %1717 = vmatprep.subr.mxu0 0.0
    %1718 = vmatpush1.msra.mxu0 0.0
    %1719 = vmatprep.subr.mxu0 0.0
    %1720 = vmatpush1.msra.mxu0 0.0
    %1721 = vmatprep.subr.mxu0 0.0
    %1722 = vmatpush1.msra.mxu0 0.0
    %1723 = vmatprep.subr.mxu0 0.0
    %1724 = vmatpush1.msra.mxu0 0.0
    %1725 = vmatprep.subr.mxu0 0.0
    %1726 = vmatpush1.msra.mxu0 0.0
    %1727 = vmatprep.subr.mxu0 0.0
    %1728 = vmatpush1.msra.mxu0 0.0
    %1729 = vmatprep.subr.mxu0 0.0
    %1730 = vmatpush1.msra.mxu0 0.0
    %1731 = vmatprep.subr.mxu0 0.0
    %1732 = vmatpush1.msra.mxu0 0.0
    %1733 = vmatprep.subr.mxu0 0.0
    %1734 = vmatpush1.msra.mxu0 0.0
    %1735 = vmatprep.subr.mxu0 0.0
    %1736 = vmatpush1.msra.mxu0 0.0
    %1737 = vmatprep.subr.mxu0 0.0
    %1738 = vmatpush1.msra.mxu0 0.0
    %1739 = vmatprep.mubr.f32.mxu0 0.0
    %1740 = vmatmul.mubr.f32.gmra.mrb[0].mxu0 %v1673
    %v1741 = vpop.f32.mrb[0].mxu0
    %v1742 = vadd.f32 %v1671, %v1741
    %v1743 = vpop.f32.mrb[0].mxu0
    %1744 = vdwg.mxu0
    %1745 = vst [vmem:[%s2] sm:$0xff] %v1742
    // Predicated region
    $region14: #{darts_graphnet_forward.1} parent=1 // pred_check
      _
    $region15: #{darts_graphnet_forward.1} parent=1 // pred_check_branch
      %1747 = sbr.rel (0) target = $region17
    $region16: #{darts_graphnet_forward.1} parent=1 // pred_region
      _
    $region17: #{darts_graphnet_forward.1} parent=1 // pred_fallthru
      _
    // Predicated region
    $region18: #{darts_graphnet_forward.1} parent=1 // pred_check
      _
    $region19: #{darts_graphnet_forward.1} parent=1 // pred_check_branch
      %1749 = sbr.rel (0) target = $region21
    $region20: #{darts_graphnet_forward.1} parent=1 // pred_region
      _
    $region21: #{darts_graphnet_forward.1} parent=1 // pred_fallthru
      _
    %1750 = vsyncpa [#allocation3], 1

</llo_original>
